<compile_context>
chip_gen: v5e
topology: v5e:2x2
jax: 0.10.0
libtpu: 0.0.40
codegen_flags: <defaults>
</compile_context>

<pallas_src>
import jax
import jax.numpy as jnp
from jax.experimental import pallas as pl
from jax.experimental.pallas import tpu as pltpu

# Make the pure-JAX reference use high-precision matmuls so the correctness
# check below compares like-for-like with the in-kernel f32 accumulation.
jax.config.update("jax_default_matmul_precision", "highest")


# ----------------------------------------------------------------------------
# Fused kernel:
#   h = relu(A @ (X @ W0)); for i>0: h = relu(A @ (h @ Wi))
#   out[:, :H_out] = h ; out[:, H_out:] = X        (skip concat)
# ----------------------------------------------------------------------------
def make_skip_gcn_kernel(num_layers, h_out):
    def kernel(a_ref, x_ref, *refs):
        w_refs = refs[:num_layers]
        o_ref = refs[num_layers]

        a = a_ref[...]                                   # (N, N), loaded once
        x = x_ref[...]                                   # (N, F)

        # Layer 0: relu(A @ (X @ W0))
        # (For very large N one could cast `a` / intermediates to bf16 for the
        #  MXU while keeping f32 accumulation; at these shapes the kernel is
        #  launch-overhead-bound, so operands stay f32 for exact semantics.)
        h = jnp.dot(x, w_refs[0][...], preferred_element_type=jnp.float32)
        h = jnp.maximum(jnp.dot(a, h, preferred_element_type=jnp.float32), 0.0)

        # Layers 1..num_layers-1: relu(A @ (h @ Wi))   (static Python unroll)
        for i in range(1, num_layers):
            h = jnp.dot(h, w_refs[i][...], preferred_element_type=jnp.float32)
            h = jnp.maximum(jnp.dot(a, h, preferred_element_type=jnp.float32),
                            0.0)

        # Skip connection: concat([last_l, node_feats], dim=1), written as two
        # slice stores into the (N, H_out + F) output block. The first store
        # is lane-aligned (offset 0, width H_out = 128).
        o_ref[:, :h_out] = h
        o_ref[:, h_out:] = x

    return kernel


# ----------------------------------------------------------------------------
# Wrapper: Sp_Skip_NodeFeats_GCN.forward(A_list, Nodes_list)
# ----------------------------------------------------------------------------
def sp_skip_nodefeats_gcn_forward(A_list, Nodes_list, w_list):
    Ahat = A_list[-1]                                    # (N, N)
    X = Nodes_list[-1]                                   # (N, F)
    N = Ahat.shape[0]
    F = X.shape[1]
    H_out = w_list[-1].shape[1]                          # layer_2_feats
    L = len(w_list)

    in_specs = [
        pl.BlockSpec((N, N), lambda i: (0, 0)),          # Ahat (full block)
        pl.BlockSpec((N, F), lambda i: (0, 0)),          # node feats
    ]
    for w in w_list:                                     # weights stay resident
        in_specs.append(pl.BlockSpec(w.shape, lambda i: (0, 0)))

    return pl.pallas_call(
        make_skip_gcn_kernel(L, H_out),
        out_shape=jax.ShapeDtypeStruct((N, H_out + F), jnp.float32),
        grid_spec=pltpu.PrefetchScalarGridSpec(
            num_scalar_prefetch=0,
            grid=(1,),                                   # single fused step
            in_specs=in_specs,
            out_specs=pl.BlockSpec((N, H_out + F), lambda i: (0, 0)),
        ),
        compiler_params=pltpu.CompilerParams(
            dimension_semantics=("arbitrary",)),
    )(Ahat, X, *w_list)


# ----------------------------------------------------------------------------
# Pure-JAX reference (mirrors the PyTorch forward) for correctness checking.
# ----------------------------------------------------------------------------
def reference_forward(A_list, Nodes_list, w_list):
    Ahat = A_list[-1]
    X = Nodes_list[-1]
    h = jax.nn.relu(Ahat @ (X @ w_list[0]))
    for i in range(1, len(w_list)):
        h = jax.nn.relu(Ahat @ (h @ w_list[i]))
    return jnp.concatenate([h, X], axis=1)


# ----------------------------------------------------------------------------
# Deterministic parameter init (mirrors w_list shapes in __init__)
# ----------------------------------------------------------------------------
def init_w_list(key, feats_per_node, layer_1_feats, layer_2_feats, num_layers):
    ks = jax.random.split(key, num_layers)

    def uni(k, shape):
        bound = 1.0 / jnp.sqrt(jnp.float32(shape[1]))
        return jax.random.uniform(k, shape, jnp.float32, -bound, bound)

    w_list = [uni(ks[0], (feats_per_node, layer_1_feats))]
    for i in range(1, num_layers):
        w_list.append(uni(ks[i], (layer_1_feats, layer_2_feats)))
    return w_list


if __name__ == "__main__":
    # Small shapes consistent with the module. layer_2_feats = 128 keeps the
    # concatenated output's GCN slice lane-aligned.
    T = 4                   # history length; the module only uses the last step
    N = 128                 # number of graph nodes
    feats_per_node = 32
    layer_1_feats = 64
    layer_2_feats = 128
    num_layers = 2

    key = jax.random.PRNGKey(0)
    k_a, k_x, k_w = jax.random.split(key, 3)

    # Dense "Ahat" per time step (row-normalized random adjacency-like matrices)
    A_raw = jax.random.uniform(k_a, (T, N, N), jnp.float32)
    A_raw = A_raw / jnp.sum(A_raw, axis=-1, keepdims=True)
    A_list = [A_raw[t] for t in range(T)]

    X_raw = jax.random.normal(k_x, (T, N, feats_per_node), jnp.float32)
    Nodes_list = [X_raw[t] for t in range(T)]

    w_list = init_w_list(k_w, feats_per_node, layer_1_feats, layer_2_feats,
                         num_layers)

    out = sp_skip_nodefeats_gcn_forward(A_list, Nodes_list, w_list)
    out = jax.block_until_ready(out)

    ref = reference_forward(A_list, Nodes_list, w_list)

    assert out.shape == (N, layer_2_feats + feats_per_node)
    assert bool(jnp.all(jnp.isfinite(out)))
    assert bool(jnp.allclose(out, ref, rtol=1e-2, atol=1e-2))
    print("KERNEL_OK")
</pallas_src>

<mosaic_0001>
module attributes {stable_mosaic.version = 11 : i64} {
  func.func @kernel(%arg0: i32, %arg1: memref<128x128xf32, #tpu.memory_space<vmem>>, %arg2: memref<128x32xf32, #tpu.memory_space<vmem>>, %arg3: memref<32x64xf32, #tpu.memory_space<vmem>>, %arg4: memref<64x128xf32, #tpu.memory_space<vmem>>, %arg5: memref<128x160xf32, #tpu.memory_space<vmem>>) attributes {dimension_semantics = [#tpu.dimension_semantics<arbitrary>], iteration_bounds = array<i64: 1>, scalar_prefetch = 0 : i64, scratch_operands = 0 : i64, tpu.core_type = #tpu.core_type<tc>, window_params = [{pipeline_mode = #tpu.pipeline_mode<synchronous>, transform_indices = @transform_0, window_bounds = array<i64: 128, 128>}, {pipeline_mode = #tpu.pipeline_mode<synchronous>, transform_indices = @transform_1, window_bounds = array<i64: 128, 32>}, {pipeline_mode = #tpu.pipeline_mode<synchronous>, transform_indices = @transform_2, window_bounds = array<i64: 32, 64>}, {pipeline_mode = #tpu.pipeline_mode<synchronous>, transform_indices = @transform_3, window_bounds = array<i64: 64, 128>}, {pipeline_mode = #tpu.pipeline_mode<synchronous>, transform_indices = @transform_4, window_bounds = array<i64: 128, 160>}]} {
    %c0 = arith.constant 0 : index
    %c0_0 = arith.constant 0 : index
    %0 = vector.load %arg1[%c0, %c0_0] : memref<128x128xf32, #tpu.memory_space<vmem>>, vector<128x128xf32>
    %c0_1 = arith.constant 0 : index
    %c0_2 = arith.constant 0 : index
    %1 = vector.load %arg2[%c0_1, %c0_2] : memref<128x32xf32, #tpu.memory_space<vmem>>, vector<128x32xf32>
    %c0_3 = arith.constant 0 : index
    %c0_4 = arith.constant 0 : index
    %2 = vector.load %arg3[%c0_3, %c0_4] : memref<32x64xf32, #tpu.memory_space<vmem>>, vector<32x64xf32>
    %cst = arith.constant dense<0.000000e+00> : vector<128x64xf32>
    %3 = tpu.matmul %1, %2, %cst {dimension_numbers = #tpu.dot_dimension_numbers<[1], [0], [0], [1], [0, 0, 1, 1], [], []>, precision = #tpu.contract_precision<fp32>} : vector<128x32xf32>, vector<32x64xf32>, vector<128x64xf32> -> vector<128x64xf32>
    %cst_5 = arith.constant dense<0.000000e+00> : vector<128x64xf32>
    %4 = tpu.matmul %0, %3, %cst_5 {dimension_numbers = #tpu.dot_dimension_numbers<[1], [0], [0], [1], [0, 0, 1, 1], [], []>, precision = #tpu.contract_precision<fp32>} : vector<128x128xf32>, vector<128x64xf32>, vector<128x64xf32> -> vector<128x64xf32>
    %cst_6 = arith.constant 0.000000e+00 : f32
    %5 = vector.broadcast %cst_6 : f32 to vector<128x64xf32>
    %6 = arith.maximumf %4, %5 : vector<128x64xf32>
    %c0_7 = arith.constant 0 : index
    %c0_8 = arith.constant 0 : index
    %7 = vector.load %arg4[%c0_7, %c0_8] : memref<64x128xf32, #tpu.memory_space<vmem>>, vector<64x128xf32>
    %cst_9 = arith.constant dense<0.000000e+00> : vector<128x128xf32>
    %8 = tpu.matmul %6, %7, %cst_9 {dimension_numbers = #tpu.dot_dimension_numbers<[1], [0], [0], [1], [0, 0, 1, 1], [], []>, precision = #tpu.contract_precision<fp32>} : vector<128x64xf32>, vector<64x128xf32>, vector<128x128xf32> -> vector<128x128xf32>
    %cst_10 = arith.constant dense<0.000000e+00> : vector<128x128xf32>
    %9 = tpu.matmul %0, %8, %cst_10 {dimension_numbers = #tpu.dot_dimension_numbers<[1], [0], [0], [1], [0, 0, 1, 1], [], []>, precision = #tpu.contract_precision<fp32>} : vector<128x128xf32>, vector<128x128xf32>, vector<128x128xf32> -> vector<128x128xf32>
    %cst_11 = arith.constant 0.000000e+00 : f32
    %10 = vector.broadcast %cst_11 : f32 to vector<128x128xf32>
    %11 = arith.maximumf %9, %10 : vector<128x128xf32>
    %c0_12 = arith.constant 0 : index
    %c0_13 = arith.constant 0 : index
    %12 = vector.load %arg5[%c0_12, %c0_13] : memref<128x160xf32, #tpu.memory_space<vmem>>, vector<128x128xf32>
    tpu.vector_store %arg5[%c0_12, %c0_13], %11 {strides = array<i32>} : memref<128x160xf32, #tpu.memory_space<vmem>>, vector<128x128xf32>,
    %c0_14 = arith.constant 0 : index
    %c128 = arith.constant 128 : index
    %13 = vector.load %arg5[%c0_14, %c128] : memref<128x160xf32, #tpu.memory_space<vmem>>, vector<128x32xf32>
    tpu.vector_store %arg5[%c0_14, %c128], %1 {strides = array<i32>} : memref<128x160xf32, #tpu.memory_space<vmem>>, vector<128x32xf32>,
    return
  }
  func.func @transform_0(%arg0: i32) -> (i32, i32) {
    %c0_i32 = arith.constant 0 : i32
    %c0_i32_0 = arith.constant 0 : i32
    %c0_i32_1 = arith.constant 0 : i32
    return %c0_i32, %c0_i32_0 : i32, i32
  }
  func.func @transform_1(%arg0: i32) -> (i32, i32) {
    %c0_i32 = arith.constant 0 : i32
    %c0_i32_0 = arith.constant 0 : i32
    %c0_i32_1 = arith.constant 0 : i32
    return %c0_i32, %c0_i32_0 : i32, i32
  }
  func.func @transform_2(%arg0: i32) -> (i32, i32) {
    %c0_i32 = arith.constant 0 : i32
    %c0_i32_0 = arith.constant 0 : i32
    %c0_i32_1 = arith.constant 0 : i32
    return %c0_i32, %c0_i32_0 : i32, i32
  }
  func.func @transform_3(%arg0: i32) -> (i32, i32) {
    %c0_i32 = arith.constant 0 : i32
    %c0_i32_0 = arith.constant 0 : i32
    %c0_i32_1 = arith.constant 0 : i32
    return %c0_i32, %c0_i32_0 : i32, i32
  }
  func.func @transform_4(%arg0: i32) -> (i32, i32) {
    %c0_i32 = arith.constant 0 : i32
    %c0_i32_0 = arith.constant 0 : i32
    %c0_i32_1 = arith.constant 0 : i32
    return %c0_i32, %c0_i32_0 : i32, i32
  }
}

</mosaic_0001>

<llo_original>
// kernel: tpu_custom_call.1
$region0: #{tpu_custom_call.1}
  #allocation0 [shape = 'u32[]', space=smem, size = 0x4, offset = 0x4, fixed_abs, tag = 'smem constant byte address 0x4 - core index']
  #allocation1 [shape = 'u32[72,128]{1,0:T(1,128)}', space=vmem, size = 0x9000, scoped, tag = 'internal scratch']
  %s0 = inlined_call_operand.vmem [shape: f32[128,128], index: 0, kind: input, shape index: {}]
  %s1 = inlined_call_operand.vmem [shape: f32[128,32], index: 1, kind: input, shape index: {}]
  %s2 = inlined_call_operand.vmem [shape: f32[32,64], index: 2, kind: input, shape index: {}]
  %s3 = inlined_call_operand.hbm [shape: f32[64,128], index: 3, kind: input, shape index: {}]
  %s4 = inlined_call_operand.vmem [shape: f32[128,160], index: 4, kind: output, shape index: {}]
  %s5 = sld [smem:[#allocation0]]
  $region30: #{tpu_custom_call.1} parent=0
    _
  %s7 = ssub.s32 1, %s5
  %s8 = scalar_select 0, %s7, %s5
  $region1: #{tpu_custom_call.1} parent=0
    #allocation2 [shape = 'u8[32768]{0}', space=vmem, size = 0x8000, scoped, tag = 'input window, operand 3, single buffered']
    #allocation3 [shape = 's32[1]{0}', space=sflag, size = 0x4, scoped, tag = 'scoped memory for tpu_custom_call.1']
    %9 = vsyncpa [#allocation3], 0
    // Predicated region
    $region2: #{tpu_custom_call.1} parent=1 // pred_check
      _
    $region3: #{tpu_custom_call.1} parent=1 // pred_check_branch
      %11 = sbr.rel (0) target = $region5
    $region4: #{tpu_custom_call.1} parent=1 // pred_region
      _
    $region5: #{tpu_custom_call.1} parent=1 // pred_fallthru
      _
    // Predicated region
    $region6: #{tpu_custom_call.1} parent=1 // pred_check
      _
    $region7: #{tpu_custom_call.1} parent=1 // pred_check_branch
      %13 = sbr.rel (0) target = $region9
    $region8: #{tpu_custom_call.1} parent=1 // pred_region
      _
    $region9: #{tpu_custom_call.1} parent=1 // pred_fallthru
      _
    // Predicated region
    $region10: #{tpu_custom_call.1} parent=1 // pred_check
      _
    $region11: #{tpu_custom_call.1} parent=1 // pred_check_branch
      %15 = sbr.rel (0) target = $region13
    $region12: #{tpu_custom_call.1} parent=1 // pred_region
      _
    $region13: #{tpu_custom_call.1} parent=1 // pred_fallthru
      _
    // Predicated region
    $region14: #{tpu_custom_call.1} parent=1 // pred_check
      _
    $region15: #{tpu_custom_call.1} parent=1 // pred_check_branch
      %17 = sbr.rel (0) target = $region17
    $region16: #{tpu_custom_call.1} parent=1 // pred_region
      %19 = vsyncadd [#allocation3], 0
      %s20 = sshll.u32 %s3, 4
      %s21 = int_to_ptr.hbm [resolvable:$true] %s20
      %s22 = sshll.u32 [#allocation2], 4
      %s23 = int_to_ptr.vmem [resolvable:$true] %s22
      %28 = dma.hbm_to_vmem [thread:$0]  %s21, 1024, %s23, [#allocation3], 128, 128, 8
    $region17: #{tpu_custom_call.1} parent=1 // pred_fallthru
      _
    // Predicated region
    $region18: #{tpu_custom_call.1} parent=1 // pred_check
      _
    $region19: #{tpu_custom_call.1} parent=1 // pred_check_branch
      %30 = sbr.rel (0) target = $region21
    $region20: #{tpu_custom_call.1} parent=1 // pred_region
      %32 = dma.done [#allocation3], 1024
    $region21: #{tpu_custom_call.1} parent=1 // pred_fallthru
      _
    %v33 = vld [vmem:[%s0] sm:$0xff]
    %v34 = vld [vmem:[%s0 + $0x8] sm:$0xff]
    %v35 = vld [vmem:[%s0 + $0x10] sm:$0xff]
    %v36 = vld [vmem:[%s0 + $0x18] sm:$0xff]
    %v37 = vld [vmem:[%s0 + $0x20] sm:$0xff]
    %v38 = vld [vmem:[%s0 + $0x28] sm:$0xff]
    %v39 = vld [vmem:[%s0 + $0x30] sm:$0xff]
    %v40 = vld [vmem:[%s0 + $0x38] sm:$0xff]
    %v41 = vld [vmem:[%s0 + $0x40] sm:$0xff]
    %v42 = vld [vmem:[%s0 + $0x48] sm:$0xff]
    %v43 = vld [vmem:[%s0 + $0x50] sm:$0xff]
    %v44 = vld [vmem:[%s0 + $0x58] sm:$0xff]
    %v45 = vld [vmem:[%s0 + $0x60] sm:$0xff]
    %v46 = vld [vmem:[%s0 + $0x68] sm:$0xff]
    %v47 = vld [vmem:[%s0 + $0x70] sm:$0xff]
    %v48 = vld [vmem:[%s0 + $0x78] sm:$0xff]
    %v49 = vld [vmem:[%s1] sm:$0xff]
    %v50 = vld [vmem:[%s1 + $0x8] sm:$0xff]
    %v51 = vld [vmem:[%s1 + $0x10] sm:$0xff]
    %v52 = vld [vmem:[%s1 + $0x18] sm:$0xff]
    %v53 = vld [vmem:[%s1 + $0x20] sm:$0xff]
    %v54 = vld [vmem:[%s1 + $0x28] sm:$0xff]
    %v55 = vld [vmem:[%s1 + $0x30] sm:$0xff]
    %v56 = vld [vmem:[%s1 + $0x38] sm:$0xff]
    %v57 = vld [vmem:[%s1 + $0x40] sm:$0xff]
    %v58 = vld [vmem:[%s1 + $0x48] sm:$0xff]
    %v59 = vld [vmem:[%s1 + $0x50] sm:$0xff]
    %v60 = vld [vmem:[%s1 + $0x58] sm:$0xff]
    %v61 = vld [vmem:[%s1 + $0x60] sm:$0xff]
    %v62 = vld [vmem:[%s1 + $0x68] sm:$0xff]
    %v63 = vld [vmem:[%s1 + $0x70] sm:$0xff]
    %v64 = vld [vmem:[%s1 + $0x78] sm:$0xff]
    %v65 = vld [vmem:[%s2] sm:$0xff]
    %v66 = vld [vmem:[%s2 + $0x8] sm:$0xff]
    %v67 = vld [vmem:[%s2 + $0x10] sm:$0xff]
    %v68 = vld [vmem:[%s2 + $0x18] sm:$0xff]
    %vm69 = vcmask 261120
    %v71 = vsel %vm69, %v49, 0
    %v74 = vsel %vm69, %v50, 0
    %v77 = vsel %vm69, %v51, 0
    %v80 = vsel %vm69, %v52, 0
    %v83 = vsel %vm69, %v53, 0
    %v86 = vsel %vm69, %v54, 0
    %v89 = vsel %vm69, %v55, 0
    %v92 = vsel %vm69, %v56, 0
    %v95 = vsel %vm69, %v57, 0
    %v98 = vsel %vm69, %v58, 0
    %v101 = vsel %vm69, %v59, 0
    %v104 = vsel %vm69, %v60, 0
    %v107 = vsel %vm69, %v61, 0
    %v110 = vsel %vm69, %v62, 0
    %v113 = vsel %vm69, %v63, 0
    %v116 = vsel %vm69, %v64, 0
    %118 = vmatpush.msra.mxu0 0.0
    %119 = vmatpush.msra.mxu0 0.0
    %120 = vmatpush.msra.mxu0 0.0
    %121 = vmatpush.msra.mxu0 0.0
    %122 = vmatpush.msra.mxu0 0.0
    %123 = vmatpush.msra.mxu0 0.0
    %124 = vmatpush.msra.mxu0 0.0
    %125 = vmatpush.msra.mxu0 0.0
    %126 = vmatpush.msra.mxu0 0.0
    %127 = vmatpush.msra.mxu0 0.0
    %128 = vmatpush.msra.mxu0 0.0
    %129 = vmatpush.msra.mxu0 0.0
    %v130 = vand.u32 %v68, 4294901760
    %131 = vmatpush.msra.mxu0 %v130
    %v132 = vand.u32 %v67, 4294901760
    %133 = vmatpush.msra.mxu0 %v132
    %v134 = vand.u32 %v66, 4294901760
    %135 = vmatpush.msra.mxu0 %v134
    %v136 = vand.u32 %v65, 4294901760
    %137 = vmatpush.msra.mxu0 %v136
    %v138 = vand.u32 %v71, 4294901760
    %v139 = vsub.f32 %v71, %v138
    %v140 = vand.u32 %v139, 4294901760
    %v141 = vsub.f32 %v139, %v140
    %v142 = vand.u32 %v141, 4294901760
    %143 = vmatmul.f32.gmra.mxu0 %v142
    %v144 = vpop.f32.mrf.mxu0
    %v145 = vadd.f32 0.0, %v144
    %v146 = vand.u32 %v74, 4294901760
    %v147 = vsub.f32 %v74, %v146
    %v148 = vand.u32 %v147, 4294901760
    %v149 = vsub.f32 %v147, %v148
    %v150 = vand.u32 %v149, 4294901760
    %151 = vmatmul.f32.gmra.mxu0 %v150
    %v152 = vpop.f32.mrf.mxu0
    %v153 = vadd.f32 0.0, %v152
    %v154 = vand.u32 %v77, 4294901760
    %v155 = vsub.f32 %v77, %v154
    %v156 = vand.u32 %v155, 4294901760
    %v157 = vsub.f32 %v155, %v156
    %v158 = vand.u32 %v157, 4294901760
    %159 = vmatmul.f32.gmra.mxu0 %v158
    %v160 = vpop.f32.mrf.mxu0
    %v161 = vadd.f32 0.0, %v160
    %v162 = vand.u32 %v80, 4294901760
    %v163 = vsub.f32 %v80, %v162
    %v164 = vand.u32 %v163, 4294901760
    %v165 = vsub.f32 %v163, %v164
    %v166 = vand.u32 %v165, 4294901760
    %167 = vmatmul.f32.gmra.mxu0 %v166
    %v168 = vpop.f32.mrf.mxu0
    %v169 = vadd.f32 0.0, %v168
    %v170 = vand.u32 %v83, 4294901760
    %v171 = vsub.f32 %v83, %v170
    %v172 = vand.u32 %v171, 4294901760
    %v173 = vsub.f32 %v171, %v172
    %v174 = vand.u32 %v173, 4294901760
    %175 = vmatmul.f32.gmra.mxu0 %v174
    %v176 = vpop.f32.mrf.mxu0
    %v177 = vadd.f32 0.0, %v176
    %v178 = vand.u32 %v86, 4294901760
    %v179 = vsub.f32 %v86, %v178
    %v180 = vand.u32 %v179, 4294901760
    %v181 = vsub.f32 %v179, %v180
    %v182 = vand.u32 %v181, 4294901760
    %183 = vmatmul.f32.gmra.mxu0 %v182
    %v184 = vpop.f32.mrf.mxu0
    %v185 = vadd.f32 0.0, %v184
    %v186 = vand.u32 %v89, 4294901760
    %v187 = vsub.f32 %v89, %v186
    %v188 = vand.u32 %v187, 4294901760
    %v189 = vsub.f32 %v187, %v188
    %v190 = vand.u32 %v189, 4294901760
    %191 = vmatmul.f32.gmra.mxu0 %v190
    %v192 = vpop.f32.mrf.mxu0
    %v193 = vadd.f32 0.0, %v192
    %v194 = vand.u32 %v92, 4294901760
    %v195 = vsub.f32 %v92, %v194
    %v196 = vand.u32 %v195, 4294901760
    %v197 = vsub.f32 %v195, %v196
    %v198 = vand.u32 %v197, 4294901760
    %199 = vmatmul.f32.gmra.mxu0 %v198
    %v200 = vpop.f32.mrf.mxu0
    %v201 = vadd.f32 0.0, %v200
    %v202 = vand.u32 %v95, 4294901760
    %v203 = vsub.f32 %v95, %v202
    %v204 = vand.u32 %v203, 4294901760
    %v205 = vsub.f32 %v203, %v204
    %v206 = vand.u32 %v205, 4294901760
    %207 = vmatmul.f32.gmra.mxu0 %v206
    %v208 = vpop.f32.mrf.mxu0
    %v209 = vadd.f32 0.0, %v208
    %v210 = vand.u32 %v98, 4294901760
    %v211 = vsub.f32 %v98, %v210
    %v212 = vand.u32 %v211, 4294901760
    %v213 = vsub.f32 %v211, %v212
    %v214 = vand.u32 %v213, 4294901760
    %215 = vmatmul.f32.gmra.mxu0 %v214
    %v216 = vpop.f32.mrf.mxu0
    %v217 = vadd.f32 0.0, %v216
    %v218 = vand.u32 %v101, 4294901760
    %v219 = vsub.f32 %v101, %v218
    %v220 = vand.u32 %v219, 4294901760
    %v221 = vsub.f32 %v219, %v220
    %v222 = vand.u32 %v221, 4294901760
    %223 = vmatmul.f32.gmra.mxu0 %v222
    %v224 = vpop.f32.mrf.mxu0
    %v225 = vadd.f32 0.0, %v224
    %v226 = vand.u32 %v104, 4294901760
    %v227 = vsub.f32 %v104, %v226
    %v228 = vand.u32 %v227, 4294901760
    %v229 = vsub.f32 %v227, %v228
    %v230 = vand.u32 %v229, 4294901760
    %231 = vmatmul.f32.gmra.mxu0 %v230
    %v232 = vpop.f32.mrf.mxu0
    %v233 = vadd.f32 0.0, %v232
    %v234 = vand.u32 %v107, 4294901760
    %v235 = vsub.f32 %v107, %v234
    %v236 = vand.u32 %v235, 4294901760
    %v237 = vsub.f32 %v235, %v236
    %v238 = vand.u32 %v237, 4294901760
    %239 = vmatmul.f32.gmra.mxu0 %v238
    %v240 = vpop.f32.mrf.mxu0
    %v241 = vadd.f32 0.0, %v240
    %v242 = vand.u32 %v110, 4294901760
    %v243 = vsub.f32 %v110, %v242
    %v244 = vand.u32 %v243, 4294901760
    %v245 = vsub.f32 %v243, %v244
    %v246 = vand.u32 %v245, 4294901760
    %247 = vmatmul.f32.gmra.mxu0 %v246
    %v248 = vpop.f32.mrf.mxu0
    %v249 = vadd.f32 0.0, %v248
    %v250 = vand.u32 %v113, 4294901760
    %v251 = vsub.f32 %v113, %v250
    %v252 = vand.u32 %v251, 4294901760
    %v253 = vsub.f32 %v251, %v252
    %v254 = vand.u32 %v253, 4294901760
    %255 = vmatmul.f32.gmra.mxu0 %v254
    %v256 = vpop.f32.mrf.mxu0
    %v257 = vadd.f32 0.0, %v256
    %v258 = vand.u32 %v116, 4294901760
    %v259 = vsub.f32 %v116, %v258
    %v260 = vand.u32 %v259, 4294901760
    %v261 = vsub.f32 %v259, %v260
    %v262 = vand.u32 %v261, 4294901760
    %263 = vmatmul.f32.gmra.mxu0 %v262
    %v264 = vpop.f32.mrf.mxu0
    %v265 = vadd.f32 0.0, %v264
    %266 = vdwg.mxu0
    %267 = vmatpush.msra.mxu0 0.0
    %268 = vmatpush.msra.mxu0 0.0
    %269 = vmatpush.msra.mxu0 0.0
    %270 = vmatpush.msra.mxu0 0.0
    %271 = vmatpush.msra.mxu0 0.0
    %272 = vmatpush.msra.mxu0 0.0
    %273 = vmatpush.msra.mxu0 0.0
    %274 = vmatpush.msra.mxu0 0.0
    %275 = vmatpush.msra.mxu0 0.0
    %276 = vmatpush.msra.mxu0 0.0
    %277 = vmatpush.msra.mxu0 0.0
    %278 = vmatpush.msra.mxu0 0.0
    %v279 = vand.u32 %v68, 4294901760
    %v280 = vsub.f32 %v68, %v279
    %v281 = vand.u32 %v280, 4294901760
    %v282 = vsub.f32 %v280, %v281
    %v283 = vand.u32 %v282, 4294901760
    %284 = vmatpush.msra.mxu0 %v283
    %v285 = vand.u32 %v67, 4294901760
    %v286 = vsub.f32 %v67, %v285
    %v287 = vand.u32 %v286, 4294901760
    %v288 = vsub.f32 %v286, %v287
    %v289 = vand.u32 %v288, 4294901760
    %290 = vmatpush.msra.mxu0 %v289
    %v291 = vand.u32 %v66, 4294901760
    %v292 = vsub.f32 %v66, %v291
    %v293 = vand.u32 %v292, 4294901760
    %v294 = vsub.f32 %v292, %v293
    %v295 = vand.u32 %v294, 4294901760
    %296 = vmatpush.msra.mxu0 %v295
    %v297 = vand.u32 %v65, 4294901760
    %v298 = vsub.f32 %v65, %v297
    %v299 = vand.u32 %v298, 4294901760
    %v300 = vsub.f32 %v298, %v299
    %v301 = vand.u32 %v300, 4294901760
    %302 = vmatpush.msra.mxu0 %v301
    %v303 = vand.u32 %v71, 4294901760
    %304 = vmatmul.f32.gmra.mxu0 %v303
    %v305 = vpop.f32.mrf.mxu0
    %v306 = vadd.f32 %v145, %v305
    %v307 = vand.u32 %v74, 4294901760
    %308 = vmatmul.f32.gmra.mxu0 %v307
    %v309 = vpop.f32.mrf.mxu0
    %v310 = vadd.f32 %v153, %v309
    %v311 = vand.u32 %v77, 4294901760
    %312 = vmatmul.f32.gmra.mxu0 %v311
    %v313 = vpop.f32.mrf.mxu0
    %v314 = vadd.f32 %v161, %v313
    %v315 = vand.u32 %v80, 4294901760
    %316 = vmatmul.f32.gmra.mxu0 %v315
    %v317 = vpop.f32.mrf.mxu0
    %v318 = vadd.f32 %v169, %v317
    %v319 = vand.u32 %v83, 4294901760
    %320 = vmatmul.f32.gmra.mxu0 %v319
    %v321 = vpop.f32.mrf.mxu0
    %v322 = vadd.f32 %v177, %v321
    %v323 = vand.u32 %v86, 4294901760
    %324 = vmatmul.f32.gmra.mxu0 %v323
    %v325 = vpop.f32.mrf.mxu0
    %v326 = vadd.f32 %v185, %v325
    %v327 = vand.u32 %v89, 4294901760
    %328 = vmatmul.f32.gmra.mxu0 %v327
    %v329 = vpop.f32.mrf.mxu0
    %v330 = vadd.f32 %v193, %v329
    %v331 = vand.u32 %v92, 4294901760
    %332 = vmatmul.f32.gmra.mxu0 %v331
    %v333 = vpop.f32.mrf.mxu0
    %v334 = vadd.f32 %v201, %v333
    %v335 = vand.u32 %v95, 4294901760
    %336 = vmatmul.f32.gmra.mxu0 %v335
    %v337 = vpop.f32.mrf.mxu0
    %v338 = vadd.f32 %v209, %v337
    %v339 = vand.u32 %v98, 4294901760
    %340 = vmatmul.f32.gmra.mxu0 %v339
    %v341 = vpop.f32.mrf.mxu0
    %v342 = vadd.f32 %v217, %v341
    %v343 = vand.u32 %v101, 4294901760
    %344 = vmatmul.f32.gmra.mxu0 %v343
    %v345 = vpop.f32.mrf.mxu0
    %v346 = vadd.f32 %v225, %v345
    %v347 = vand.u32 %v104, 4294901760
    %348 = vmatmul.f32.gmra.mxu0 %v347
    %v349 = vpop.f32.mrf.mxu0
    %v350 = vadd.f32 %v233, %v349
    %v351 = vand.u32 %v107, 4294901760
    %352 = vmatmul.f32.gmra.mxu0 %v351
    %v353 = vpop.f32.mrf.mxu0
    %v354 = vadd.f32 %v241, %v353
    %v355 = vand.u32 %v110, 4294901760
    %356 = vmatmul.f32.gmra.mxu0 %v355
    %v357 = vpop.f32.mrf.mxu0
    %v358 = vadd.f32 %v249, %v357
    %v359 = vand.u32 %v113, 4294901760
    %360 = vmatmul.f32.gmra.mxu0 %v359
    %v361 = vpop.f32.mrf.mxu0
    %v362 = vadd.f32 %v257, %v361
    %v363 = vand.u32 %v116, 4294901760
    %364 = vmatmul.f32.gmra.mxu0 %v363
    %v365 = vpop.f32.mrf.mxu0
    %v366 = vadd.f32 %v265, %v365
    %367 = vdwg.mxu0
    %368 = vmatpush.msra.mxu0 0.0
    %369 = vmatpush.msra.mxu0 0.0
    %370 = vmatpush.msra.mxu0 0.0
    %371 = vmatpush.msra.mxu0 0.0
    %372 = vmatpush.msra.mxu0 0.0
    %373 = vmatpush.msra.mxu0 0.0
    %374 = vmatpush.msra.mxu0 0.0
    %375 = vmatpush.msra.mxu0 0.0
    %376 = vmatpush.msra.mxu0 0.0
    %377 = vmatpush.msra.mxu0 0.0
    %378 = vmatpush.msra.mxu0 0.0
    %379 = vmatpush.msra.mxu0 0.0
    %v380 = vand.u32 %v68, 4294901760
    %v381 = vsub.f32 %v68, %v380
    %382 = vmatpush.msra.mxu0 %v381
    %v383 = vand.u32 %v67, 4294901760
    %v384 = vsub.f32 %v67, %v383
    %385 = vmatpush.msra.mxu0 %v384
    %v386 = vand.u32 %v66, 4294901760
    %v387 = vsub.f32 %v66, %v386
    %388 = vmatpush.msra.mxu0 %v387
    %v389 = vand.u32 %v65, 4294901760
    %v390 = vsub.f32 %v65, %v389
    %391 = vmatpush.msra.mxu0 %v390
    %v392 = vand.u32 %v71, 4294901760
    %v393 = vsub.f32 %v71, %v392
    %394 = vmatmul.f32.gmra.mxu0 %v393
    %v395 = vpop.f32.mrf.mxu0
    %v396 = vadd.f32 %v306, %v395
    %v397 = vand.u32 %v74, 4294901760
    %v398 = vsub.f32 %v74, %v397
    %399 = vmatmul.f32.gmra.mxu0 %v398
    %v400 = vpop.f32.mrf.mxu0
    %v401 = vadd.f32 %v310, %v400
    %v402 = vand.u32 %v77, 4294901760
    %v403 = vsub.f32 %v77, %v402
    %404 = vmatmul.f32.gmra.mxu0 %v403
    %v405 = vpop.f32.mrf.mxu0
    %v406 = vadd.f32 %v314, %v405
    %v407 = vand.u32 %v80, 4294901760
    %v408 = vsub.f32 %v80, %v407
    %409 = vmatmul.f32.gmra.mxu0 %v408
    %v410 = vpop.f32.mrf.mxu0
    %v411 = vadd.f32 %v318, %v410
    %v412 = vand.u32 %v83, 4294901760
    %v413 = vsub.f32 %v83, %v412
    %414 = vmatmul.f32.gmra.mxu0 %v413
    %v415 = vpop.f32.mrf.mxu0
    %v416 = vadd.f32 %v322, %v415
    %v417 = vand.u32 %v86, 4294901760
    %v418 = vsub.f32 %v86, %v417
    %419 = vmatmul.f32.gmra.mxu0 %v418
    %v420 = vpop.f32.mrf.mxu0
    %v421 = vadd.f32 %v326, %v420
    %v422 = vand.u32 %v89, 4294901760
    %v423 = vsub.f32 %v89, %v422
    %424 = vmatmul.f32.gmra.mxu0 %v423
    %v425 = vpop.f32.mrf.mxu0
    %v426 = vadd.f32 %v330, %v425
    %v427 = vand.u32 %v92, 4294901760
    %v428 = vsub.f32 %v92, %v427
    %429 = vmatmul.f32.gmra.mxu0 %v428
    %v430 = vpop.f32.mrf.mxu0
    %v431 = vadd.f32 %v334, %v430
    %v432 = vand.u32 %v95, 4294901760
    %v433 = vsub.f32 %v95, %v432
    %434 = vmatmul.f32.gmra.mxu0 %v433
    %v435 = vpop.f32.mrf.mxu0
    %v436 = vadd.f32 %v338, %v435
    %v437 = vand.u32 %v98, 4294901760
    %v438 = vsub.f32 %v98, %v437
    %439 = vmatmul.f32.gmra.mxu0 %v438
    %v440 = vpop.f32.mrf.mxu0
    %v441 = vadd.f32 %v342, %v440
    %v442 = vand.u32 %v101, 4294901760
    %v443 = vsub.f32 %v101, %v442
    %444 = vmatmul.f32.gmra.mxu0 %v443
    %v445 = vpop.f32.mrf.mxu0
    %v446 = vadd.f32 %v346, %v445
    %v447 = vand.u32 %v104, 4294901760
    %v448 = vsub.f32 %v104, %v447
    %449 = vmatmul.f32.gmra.mxu0 %v448
    %v450 = vpop.f32.mrf.mxu0
    %v451 = vadd.f32 %v350, %v450
    %v452 = vand.u32 %v107, 4294901760
    %v453 = vsub.f32 %v107, %v452
    %454 = vmatmul.f32.gmra.mxu0 %v453
    %v455 = vpop.f32.mrf.mxu0
    %v456 = vadd.f32 %v354, %v455
    %v457 = vand.u32 %v110, 4294901760
    %v458 = vsub.f32 %v110, %v457
    %459 = vmatmul.f32.gmra.mxu0 %v458
    %v460 = vpop.f32.mrf.mxu0
    %v461 = vadd.f32 %v358, %v460
    %v462 = vand.u32 %v113, 4294901760
    %v463 = vsub.f32 %v113, %v462
    %464 = vmatmul.f32.gmra.mxu0 %v463
    %v465 = vpop.f32.mrf.mxu0
    %v466 = vadd.f32 %v362, %v465
    %v467 = vand.u32 %v116, 4294901760
    %v468 = vsub.f32 %v116, %v467
    %469 = vmatmul.f32.gmra.mxu0 %v468
    %v470 = vpop.f32.mrf.mxu0
    %v471 = vadd.f32 %v366, %v470
    %472 = vdwg.mxu0
    %473 = vmatpush.msra.mxu0 0.0
    %474 = vmatpush.msra.mxu0 0.0
    %475 = vmatpush.msra.mxu0 0.0
    %476 = vmatpush.msra.mxu0 0.0
    %477 = vmatpush.msra.mxu0 0.0
    %478 = vmatpush.msra.mxu0 0.0
    %479 = vmatpush.msra.mxu0 0.0
    %480 = vmatpush.msra.mxu0 0.0
    %481 = vmatpush.msra.mxu0 0.0
    %482 = vmatpush.msra.mxu0 0.0
    %483 = vmatpush.msra.mxu0 0.0
    %484 = vmatpush.msra.mxu0 0.0
    %v485 = vand.u32 %v68, 4294901760
    %486 = vmatpush.msra.mxu0 %v485
    %v487 = vand.u32 %v67, 4294901760
    %488 = vmatpush.msra.mxu0 %v487
    %v489 = vand.u32 %v66, 4294901760
    %490 = vmatpush.msra.mxu0 %v489
    %v491 = vand.u32 %v65, 4294901760
    %492 = vmatpush.msra.mxu0 %v491
    %v493 = vand.u32 %v71, 4294901760
    %v494 = vsub.f32 %v71, %v493
    %v495 = vand.u32 %v494, 4294901760
    %496 = vmatmul.f32.gmra.mxu0 %v495
    %v497 = vpop.f32.mrf.mxu0
    %v498 = vadd.f32 %v396, %v497
    %v499 = vand.u32 %v74, 4294901760
    %v500 = vsub.f32 %v74, %v499
    %v501 = vand.u32 %v500, 4294901760
    %502 = vmatmul.f32.gmra.mxu0 %v501
    %v503 = vpop.f32.mrf.mxu0
    %v504 = vadd.f32 %v401, %v503
    %v505 = vand.u32 %v77, 4294901760
    %v506 = vsub.f32 %v77, %v505
    %v507 = vand.u32 %v506, 4294901760
    %508 = vmatmul.f32.gmra.mxu0 %v507
    %v509 = vpop.f32.mrf.mxu0
    %v510 = vadd.f32 %v406, %v509
    %v511 = vand.u32 %v80, 4294901760
    %v512 = vsub.f32 %v80, %v511
    %v513 = vand.u32 %v512, 4294901760
    %514 = vmatmul.f32.gmra.mxu0 %v513
    %v515 = vpop.f32.mrf.mxu0
    %v516 = vadd.f32 %v411, %v515
    %v517 = vand.u32 %v83, 4294901760
    %v518 = vsub.f32 %v83, %v517
    %v519 = vand.u32 %v518, 4294901760
    %520 = vmatmul.f32.gmra.mxu0 %v519
    %v521 = vpop.f32.mrf.mxu0
    %v522 = vadd.f32 %v416, %v521
    %v523 = vand.u32 %v86, 4294901760
    %v524 = vsub.f32 %v86, %v523
    %v525 = vand.u32 %v524, 4294901760
    %526 = vmatmul.f32.gmra.mxu0 %v525
    %v527 = vpop.f32.mrf.mxu0
    %v528 = vadd.f32 %v421, %v527
    %v529 = vand.u32 %v89, 4294901760
    %v530 = vsub.f32 %v89, %v529
    %v531 = vand.u32 %v530, 4294901760
    %532 = vmatmul.f32.gmra.mxu0 %v531
    %v533 = vpop.f32.mrf.mxu0
    %v534 = vadd.f32 %v426, %v533
    %v535 = vand.u32 %v92, 4294901760
    %v536 = vsub.f32 %v92, %v535
    %v537 = vand.u32 %v536, 4294901760
    %538 = vmatmul.f32.gmra.mxu0 %v537
    %v539 = vpop.f32.mrf.mxu0
    %v540 = vadd.f32 %v431, %v539
    %v541 = vand.u32 %v95, 4294901760
    %v542 = vsub.f32 %v95, %v541
    %v543 = vand.u32 %v542, 4294901760
    %544 = vmatmul.f32.gmra.mxu0 %v543
    %v545 = vpop.f32.mrf.mxu0
    %v546 = vadd.f32 %v436, %v545
    %v547 = vand.u32 %v98, 4294901760
    %v548 = vsub.f32 %v98, %v547
    %v549 = vand.u32 %v548, 4294901760
    %550 = vmatmul.f32.gmra.mxu0 %v549
    %v551 = vpop.f32.mrf.mxu0
    %v552 = vadd.f32 %v441, %v551
    %v553 = vand.u32 %v101, 4294901760
    %v554 = vsub.f32 %v101, %v553
    %v555 = vand.u32 %v554, 4294901760
    %556 = vmatmul.f32.gmra.mxu0 %v555
    %v557 = vpop.f32.mrf.mxu0
    %v558 = vadd.f32 %v446, %v557
    %v559 = vand.u32 %v104, 4294901760
    %v560 = vsub.f32 %v104, %v559
    %v561 = vand.u32 %v560, 4294901760
    %562 = vmatmul.f32.gmra.mxu0 %v561
    %v563 = vpop.f32.mrf.mxu0
    %v564 = vadd.f32 %v451, %v563
    %v565 = vand.u32 %v107, 4294901760
    %v566 = vsub.f32 %v107, %v565
    %v567 = vand.u32 %v566, 4294901760
    %568 = vmatmul.f32.gmra.mxu0 %v567
    %v569 = vpop.f32.mrf.mxu0
    %v570 = vadd.f32 %v456, %v569
    %v571 = vand.u32 %v110, 4294901760
    %v572 = vsub.f32 %v110, %v571
    %v573 = vand.u32 %v572, 4294901760
    %574 = vmatmul.f32.gmra.mxu0 %v573
    %v575 = vpop.f32.mrf.mxu0
    %v576 = vadd.f32 %v461, %v575
    %v577 = vand.u32 %v113, 4294901760
    %v578 = vsub.f32 %v113, %v577
    %v579 = vand.u32 %v578, 4294901760
    %580 = vmatmul.f32.gmra.mxu0 %v579
    %v581 = vpop.f32.mrf.mxu0
    %v582 = vadd.f32 %v466, %v581
    %v583 = vand.u32 %v116, 4294901760
    %v584 = vsub.f32 %v116, %v583
    %v585 = vand.u32 %v584, 4294901760
    %586 = vmatmul.f32.gmra.mxu0 %v585
    %v587 = vpop.f32.mrf.mxu0
    %v588 = vadd.f32 %v471, %v587
    %589 = vdwg.mxu0
    %590 = vmatpush.msra.mxu0 0.0
    %591 = vmatpush.msra.mxu0 0.0
    %592 = vmatpush.msra.mxu0 0.0
    %593 = vmatpush.msra.mxu0 0.0
    %594 = vmatpush.msra.mxu0 0.0
    %595 = vmatpush.msra.mxu0 0.0
    %596 = vmatpush.msra.mxu0 0.0
    %597 = vmatpush.msra.mxu0 0.0
    %598 = vmatpush.msra.mxu0 0.0
    %599 = vmatpush.msra.mxu0 0.0
    %600 = vmatpush.msra.mxu0 0.0
    %601 = vmatpush.msra.mxu0 0.0
    %v602 = vand.u32 %v68, 4294901760
    %v603 = vsub.f32 %v68, %v602
    %v604 = vand.u32 %v603, 4294901760
    %605 = vmatpush.msra.mxu0 %v604
    %v606 = vand.u32 %v67, 4294901760
    %v607 = vsub.f32 %v67, %v606
    %v608 = vand.u32 %v607, 4294901760
    %609 = vmatpush.msra.mxu0 %v608
    %v610 = vand.u32 %v66, 4294901760
    %v611 = vsub.f32 %v66, %v610
    %v612 = vand.u32 %v611, 4294901760
    %613 = vmatpush.msra.mxu0 %v612
    %v614 = vand.u32 %v65, 4294901760
    %v615 = vsub.f32 %v65, %v614
    %v616 = vand.u32 %v615, 4294901760
    %617 = vmatpush.msra.mxu0 %v616
    %v618 = vand.u32 %v71, 4294901760
    %619 = vmatmul.f32.gmra.mxu0 %v618
    %v620 = vpop.f32.mrf.mxu0
    %v621 = vadd.f32 %v498, %v620
    %v622 = vand.u32 %v74, 4294901760
    %623 = vmatmul.f32.gmra.mxu0 %v622
    %v624 = vpop.f32.mrf.mxu0
    %v625 = vadd.f32 %v504, %v624
    %v626 = vand.u32 %v77, 4294901760
    %627 = vmatmul.f32.gmra.mxu0 %v626
    %v628 = vpop.f32.mrf.mxu0
    %v629 = vadd.f32 %v510, %v628
    %v630 = vand.u32 %v80, 4294901760
    %631 = vmatmul.f32.gmra.mxu0 %v630
    %v632 = vpop.f32.mrf.mxu0
    %v633 = vadd.f32 %v516, %v632
    %v634 = vand.u32 %v83, 4294901760
    %635 = vmatmul.f32.gmra.mxu0 %v634
    %v636 = vpop.f32.mrf.mxu0
    %v637 = vadd.f32 %v522, %v636
    %v638 = vand.u32 %v86, 4294901760
    %639 = vmatmul.f32.gmra.mxu0 %v638
    %v640 = vpop.f32.mrf.mxu0
    %v641 = vadd.f32 %v528, %v640
    %v642 = vand.u32 %v89, 4294901760
    %643 = vmatmul.f32.gmra.mxu0 %v642
    %v644 = vpop.f32.mrf.mxu0
    %v645 = vadd.f32 %v534, %v644
    %v646 = vand.u32 %v92, 4294901760
    %647 = vmatmul.f32.gmra.mxu0 %v646
    %v648 = vpop.f32.mrf.mxu0
    %v649 = vadd.f32 %v540, %v648
    %v650 = vand.u32 %v95, 4294901760
    %651 = vmatmul.f32.gmra.mxu0 %v650
    %v652 = vpop.f32.mrf.mxu0
    %v653 = vadd.f32 %v546, %v652
    %v654 = vand.u32 %v98, 4294901760
    %655 = vmatmul.f32.gmra.mxu0 %v654
    %v656 = vpop.f32.mrf.mxu0
    %v657 = vadd.f32 %v552, %v656
    %v658 = vand.u32 %v101, 4294901760
    %659 = vmatmul.f32.gmra.mxu0 %v658
    %v660 = vpop.f32.mrf.mxu0
    %v661 = vadd.f32 %v558, %v660
    %v662 = vand.u32 %v104, 4294901760
    %663 = vmatmul.f32.gmra.mxu0 %v662
    %v664 = vpop.f32.mrf.mxu0
    %v665 = vadd.f32 %v564, %v664
    %v666 = vand.u32 %v107, 4294901760
    %667 = vmatmul.f32.gmra.mxu0 %v666
    %v668 = vpop.f32.mrf.mxu0
    %v669 = vadd.f32 %v570, %v668
    %v670 = vand.u32 %v110, 4294901760
    %671 = vmatmul.f32.gmra.mxu0 %v670
    %v672 = vpop.f32.mrf.mxu0
    %v673 = vadd.f32 %v576, %v672
    %v674 = vand.u32 %v113, 4294901760
    %675 = vmatmul.f32.gmra.mxu0 %v674
    %v676 = vpop.f32.mrf.mxu0
    %v677 = vadd.f32 %v582, %v676
    %v678 = vand.u32 %v116, 4294901760
    %679 = vmatmul.f32.gmra.mxu0 %v678
    %v680 = vpop.f32.mrf.mxu0
    %v681 = vadd.f32 %v588, %v680
    %682 = vdwg.mxu0
    %683 = vmatpush.msra.mxu0 0.0
    %684 = vmatpush.msra.mxu0 0.0
    %685 = vmatpush.msra.mxu0 0.0
    %686 = vmatpush.msra.mxu0 0.0
    %687 = vmatpush.msra.mxu0 0.0
    %688 = vmatpush.msra.mxu0 0.0
    %689 = vmatpush.msra.mxu0 0.0
    %690 = vmatpush.msra.mxu0 0.0
    %691 = vmatpush.msra.mxu0 0.0
    %692 = vmatpush.msra.mxu0 0.0
    %693 = vmatpush.msra.mxu0 0.0
    %694 = vmatpush.msra.mxu0 0.0
    %v695 = vand.u32 %v68, 4294901760
    %696 = vmatpush.msra.mxu0 %v695
    %v697 = vand.u32 %v67, 4294901760
    %698 = vmatpush.msra.mxu0 %v697
    %v699 = vand.u32 %v66, 4294901760
    %700 = vmatpush.msra.mxu0 %v699
    %v701 = vand.u32 %v65, 4294901760
    %702 = vmatpush.msra.mxu0 %v701
    %v703 = vand.u32 %v71, 4294901760
    %704 = vmatmul.f32.gmra.mxu0 %v703
    %v705 = vpop.f32.mrf.mxu0
    %v706 = vadd.f32 %v621, %v705
    %v707 = vand.u32 %v74, 4294901760
    %708 = vmatmul.f32.gmra.mxu0 %v707
    %v709 = vpop.f32.mrf.mxu0
    %v710 = vadd.f32 %v625, %v709
    %v711 = vand.u32 %v77, 4294901760
    %712 = vmatmul.f32.gmra.mxu0 %v711
    %v713 = vpop.f32.mrf.mxu0
    %v714 = vadd.f32 %v629, %v713
    %v715 = vand.u32 %v80, 4294901760
    %716 = vmatmul.f32.gmra.mxu0 %v715
    %v717 = vpop.f32.mrf.mxu0
    %v718 = vadd.f32 %v633, %v717
    %v719 = vand.u32 %v83, 4294901760
    %720 = vmatmul.f32.gmra.mxu0 %v719
    %v721 = vpop.f32.mrf.mxu0
    %v722 = vadd.f32 %v637, %v721
    %v723 = vand.u32 %v86, 4294901760
    %724 = vmatmul.f32.gmra.mxu0 %v723
    %v725 = vpop.f32.mrf.mxu0
    %v726 = vadd.f32 %v641, %v725
    %v727 = vand.u32 %v89, 4294901760
    %728 = vmatmul.f32.gmra.mxu0 %v727
    %v729 = vpop.f32.mrf.mxu0
    %v730 = vadd.f32 %v645, %v729
    %v731 = vand.u32 %v92, 4294901760
    %732 = vmatmul.f32.gmra.mxu0 %v731
    %v733 = vpop.f32.mrf.mxu0
    %v734 = vadd.f32 %v649, %v733
    %v735 = vand.u32 %v95, 4294901760
    %736 = vmatmul.f32.gmra.mxu0 %v735
    %v737 = vpop.f32.mrf.mxu0
    %v738 = vadd.f32 %v653, %v737
    %v739 = vand.u32 %v98, 4294901760
    %740 = vmatmul.f32.gmra.mxu0 %v739
    %v741 = vpop.f32.mrf.mxu0
    %v742 = vadd.f32 %v657, %v741
    %v743 = vand.u32 %v101, 4294901760
    %744 = vmatmul.f32.gmra.mxu0 %v743
    %v745 = vpop.f32.mrf.mxu0
    %v746 = vadd.f32 %v661, %v745
    %v747 = vand.u32 %v104, 4294901760
    %748 = vmatmul.f32.gmra.mxu0 %v747
    %v749 = vpop.f32.mrf.mxu0
    %v750 = vadd.f32 %v665, %v749
    %v751 = vand.u32 %v107, 4294901760
    %752 = vmatmul.f32.gmra.mxu0 %v751
    %v753 = vpop.f32.mrf.mxu0
    %v754 = vadd.f32 %v669, %v753
    %v755 = vand.u32 %v110, 4294901760
    %756 = vmatmul.f32.gmra.mxu0 %v755
    %v757 = vpop.f32.mrf.mxu0
    %v758 = vadd.f32 %v673, %v757
    %v759 = vand.u32 %v113, 4294901760
    %760 = vmatmul.f32.gmra.mxu0 %v759
    %v761 = vpop.f32.mrf.mxu0
    %v762 = vadd.f32 %v677, %v761
    %v763 = vand.u32 %v116, 4294901760
    %764 = vmatmul.f32.gmra.mxu0 %v763
    %v765 = vpop.f32.mrf.mxu0
    %v766 = vadd.f32 %v681, %v765
    %767 = vdwg.mxu0
    %v768 = vand.u32 %v766, 4294901760
    %769 = vmatpush.msra.mxu0 %v768
    %v770 = vand.u32 %v762, 4294901760
    %771 = vmatpush.msra.mxu0 %v770
    %v772 = vand.u32 %v758, 4294901760
    %773 = vmatpush.msra.mxu0 %v772
    %v774 = vand.u32 %v754, 4294901760
    %775 = vmatpush.msra.mxu0 %v774
    %v776 = vand.u32 %v750, 4294901760
    %777 = vmatpush.msra.mxu0 %v776
    %v778 = vand.u32 %v746, 4294901760
    %779 = vmatpush.msra.mxu0 %v778
    %v780 = vand.u32 %v742, 4294901760
    %781 = vmatpush.msra.mxu0 %v780
    %v782 = vand.u32 %v738, 4294901760
    %783 = vmatpush.msra.mxu0 %v782
    %v784 = vand.u32 %v734, 4294901760
    %785 = vmatpush.msra.mxu0 %v784
    %v786 = vand.u32 %v730, 4294901760
    %787 = vmatpush.msra.mxu0 %v786
    %v788 = vand.u32 %v726, 4294901760
    %789 = vmatpush.msra.mxu0 %v788
    %v790 = vand.u32 %v722, 4294901760
    %791 = vmatpush.msra.mxu0 %v790
    %v792 = vand.u32 %v718, 4294901760
    %793 = vmatpush.msra.mxu0 %v792
    %v794 = vand.u32 %v714, 4294901760
    %795 = vmatpush.msra.mxu0 %v794
    %v796 = vand.u32 %v710, 4294901760
    %797 = vmatpush.msra.mxu0 %v796
    %v798 = vand.u32 %v706, 4294901760
    %799 = vmatpush.msra.mxu0 %v798
    %v800 = vand.u32 %v33, 4294901760
    %v801 = vsub.f32 %v33, %v800
    %v802 = vand.u32 %v801, 4294901760
    %v803 = vsub.f32 %v801, %v802
    %v804 = vand.u32 %v803, 4294901760
    %805 = vmatmul.f32.gmra.mxu0 %v804
    %v806 = vpop.f32.mrf.mxu0
    %v807 = vadd.f32 0.0, %v806
    %v808 = vand.u32 %v34, 4294901760
    %v809 = vsub.f32 %v34, %v808
    %v810 = vand.u32 %v809, 4294901760
    %v811 = vsub.f32 %v809, %v810
    %v812 = vand.u32 %v811, 4294901760
    %813 = vmatmul.f32.gmra.mxu0 %v812
    %v814 = vpop.f32.mrf.mxu0
    %v815 = vadd.f32 0.0, %v814
    %v816 = vand.u32 %v35, 4294901760
    %v817 = vsub.f32 %v35, %v816
    %v818 = vand.u32 %v817, 4294901760
    %v819 = vsub.f32 %v817, %v818
    %v820 = vand.u32 %v819, 4294901760
    %821 = vmatmul.f32.gmra.mxu0 %v820
    %v822 = vpop.f32.mrf.mxu0
    %v823 = vadd.f32 0.0, %v822
    %v824 = vand.u32 %v36, 4294901760
    %v825 = vsub.f32 %v36, %v824
    %v826 = vand.u32 %v825, 4294901760
    %v827 = vsub.f32 %v825, %v826
    %v828 = vand.u32 %v827, 4294901760
    %829 = vmatmul.f32.gmra.mxu0 %v828
    %v830 = vpop.f32.mrf.mxu0
    %v831 = vadd.f32 0.0, %v830
    %v832 = vand.u32 %v37, 4294901760
    %v833 = vsub.f32 %v37, %v832
    %v834 = vand.u32 %v833, 4294901760
    %v835 = vsub.f32 %v833, %v834
    %v836 = vand.u32 %v835, 4294901760
    %837 = vmatmul.f32.gmra.mxu0 %v836
    %v838 = vpop.f32.mrf.mxu0
    %v839 = vadd.f32 0.0, %v838
    %v840 = vand.u32 %v38, 4294901760
    %v841 = vsub.f32 %v38, %v840
    %v842 = vand.u32 %v841, 4294901760
    %v843 = vsub.f32 %v841, %v842
    %v844 = vand.u32 %v843, 4294901760
    %845 = vmatmul.f32.gmra.mxu0 %v844
    %v846 = vpop.f32.mrf.mxu0
    %v847 = vadd.f32 0.0, %v846
    %v848 = vand.u32 %v39, 4294901760
    %v849 = vsub.f32 %v39, %v848
    %v850 = vand.u32 %v849, 4294901760
    %v851 = vsub.f32 %v849, %v850
    %v852 = vand.u32 %v851, 4294901760
    %853 = vmatmul.f32.gmra.mxu0 %v852
    %v854 = vpop.f32.mrf.mxu0
    %v855 = vadd.f32 0.0, %v854
    %v856 = vand.u32 %v40, 4294901760
    %v857 = vsub.f32 %v40, %v856
    %v858 = vand.u32 %v857, 4294901760
    %v859 = vsub.f32 %v857, %v858
    %v860 = vand.u32 %v859, 4294901760
    %861 = vmatmul.f32.gmra.mxu0 %v860
    %v862 = vpop.f32.mrf.mxu0
    %v863 = vadd.f32 0.0, %v862
    %v864 = vand.u32 %v41, 4294901760
    %v865 = vsub.f32 %v41, %v864
    %v866 = vand.u32 %v865, 4294901760
    %v867 = vsub.f32 %v865, %v866
    %v868 = vand.u32 %v867, 4294901760
    %869 = vmatmul.f32.gmra.mxu0 %v868
    %v870 = vpop.f32.mrf.mxu0
    %v871 = vadd.f32 0.0, %v870
    %v872 = vand.u32 %v42, 4294901760
    %v873 = vsub.f32 %v42, %v872
    %v874 = vand.u32 %v873, 4294901760
    %v875 = vsub.f32 %v873, %v874
    %v876 = vand.u32 %v875, 4294901760
    %877 = vmatmul.f32.gmra.mxu0 %v876
    %v878 = vpop.f32.mrf.mxu0
    %v879 = vadd.f32 0.0, %v878
    %v880 = vand.u32 %v43, 4294901760
    %v881 = vsub.f32 %v43, %v880
    %v882 = vand.u32 %v881, 4294901760
    %v883 = vsub.f32 %v881, %v882
    %v884 = vand.u32 %v883, 4294901760
    %885 = vmatmul.f32.gmra.mxu0 %v884
    %v886 = vpop.f32.mrf.mxu0
    %v887 = vadd.f32 0.0, %v886
    %v888 = vand.u32 %v44, 4294901760
    %v889 = vsub.f32 %v44, %v888
    %v890 = vand.u32 %v889, 4294901760
    %v891 = vsub.f32 %v889, %v890
    %v892 = vand.u32 %v891, 4294901760
    %893 = vmatmul.f32.gmra.mxu0 %v892
    %v894 = vpop.f32.mrf.mxu0
    %v895 = vadd.f32 0.0, %v894
    %v896 = vand.u32 %v45, 4294901760
    %v897 = vsub.f32 %v45, %v896
    %v898 = vand.u32 %v897, 4294901760
    %v899 = vsub.f32 %v897, %v898
    %v900 = vand.u32 %v899, 4294901760
    %901 = vmatmul.f32.gmra.mxu0 %v900
    %v902 = vpop.f32.mrf.mxu0
    %v903 = vadd.f32 0.0, %v902
    %v904 = vand.u32 %v46, 4294901760
    %v905 = vsub.f32 %v46, %v904
    %v906 = vand.u32 %v905, 4294901760
    %v907 = vsub.f32 %v905, %v906
    %v908 = vand.u32 %v907, 4294901760
    %909 = vmatmul.f32.gmra.mxu0 %v908
    %v910 = vpop.f32.mrf.mxu0
    %v911 = vadd.f32 0.0, %v910
    %v912 = vand.u32 %v47, 4294901760
    %v913 = vsub.f32 %v47, %v912
    %v914 = vand.u32 %v913, 4294901760
    %v915 = vsub.f32 %v913, %v914
    %v916 = vand.u32 %v915, 4294901760
    %917 = vmatmul.f32.gmra.mxu0 %v916
    %v918 = vpop.f32.mrf.mxu0
    %v919 = vadd.f32 0.0, %v918
    %v920 = vand.u32 %v48, 4294901760
    %v921 = vsub.f32 %v48, %v920
    %v922 = vand.u32 %v921, 4294901760
    %v923 = vsub.f32 %v921, %v922
    %v924 = vand.u32 %v923, 4294901760
    %925 = vmatmul.f32.gmra.mxu0 %v924
    %v926 = vpop.f32.mrf.mxu0
    %v927 = vadd.f32 0.0, %v926
    %928 = vdwg.mxu0
    %v929 = vand.u32 %v766, 4294901760
    %v930 = vsub.f32 %v766, %v929
    %v931 = vand.u32 %v930, 4294901760
    %v932 = vsub.f32 %v930, %v931
    %v933 = vand.u32 %v932, 4294901760
    %934 = vmatpush.msra.mxu0 %v933
    %v935 = vand.u32 %v762, 4294901760
    %v936 = vsub.f32 %v762, %v935
    %v937 = vand.u32 %v936, 4294901760
    %v938 = vsub.f32 %v936, %v937
    %v939 = vand.u32 %v938, 4294901760
    %940 = vmatpush.msra.mxu0 %v939
    %v941 = vand.u32 %v758, 4294901760
    %v942 = vsub.f32 %v758, %v941
    %v943 = vand.u32 %v942, 4294901760
    %v944 = vsub.f32 %v942, %v943
    %v945 = vand.u32 %v944, 4294901760
    %946 = vmatpush.msra.mxu0 %v945
    %v947 = vand.u32 %v754, 4294901760
    %v948 = vsub.f32 %v754, %v947
    %v949 = vand.u32 %v948, 4294901760
    %v950 = vsub.f32 %v948, %v949
    %v951 = vand.u32 %v950, 4294901760
    %952 = vmatpush.msra.mxu0 %v951
    %v953 = vand.u32 %v750, 4294901760
    %v954 = vsub.f32 %v750, %v953
    %v955 = vand.u32 %v954, 4294901760
    %v956 = vsub.f32 %v954, %v955
    %v957 = vand.u32 %v956, 4294901760
    %958 = vmatpush.msra.mxu0 %v957
    %v959 = vand.u32 %v746, 4294901760
    %v960 = vsub.f32 %v746, %v959
    %v961 = vand.u32 %v960, 4294901760
    %v962 = vsub.f32 %v960, %v961
    %v963 = vand.u32 %v962, 4294901760
    %964 = vmatpush.msra.mxu0 %v963
    %v965 = vand.u32 %v742, 4294901760
    %v966 = vsub.f32 %v742, %v965
    %v967 = vand.u32 %v966, 4294901760
    %v968 = vsub.f32 %v966, %v967
    %v969 = vand.u32 %v968, 4294901760
    %970 = vmatpush.msra.mxu0 %v969
    %v971 = vand.u32 %v738, 4294901760
    %v972 = vsub.f32 %v738, %v971
    %v973 = vand.u32 %v972, 4294901760
    %v974 = vsub.f32 %v972, %v973
    %v975 = vand.u32 %v974, 4294901760
    %976 = vmatpush.msra.mxu0 %v975
    %v977 = vand.u32 %v734, 4294901760
    %v978 = vsub.f32 %v734, %v977
    %v979 = vand.u32 %v978, 4294901760
    %v980 = vsub.f32 %v978, %v979
    %v981 = vand.u32 %v980, 4294901760
    %982 = vmatpush.msra.mxu0 %v981
    %v983 = vand.u32 %v730, 4294901760
    %v984 = vsub.f32 %v730, %v983
    %v985 = vand.u32 %v984, 4294901760
    %v986 = vsub.f32 %v984, %v985
    %v987 = vand.u32 %v986, 4294901760
    %988 = vmatpush.msra.mxu0 %v987
    %v989 = vand.u32 %v726, 4294901760
    %v990 = vsub.f32 %v726, %v989
    %v991 = vand.u32 %v990, 4294901760
    %v992 = vsub.f32 %v990, %v991
    %v993 = vand.u32 %v992, 4294901760
    %994 = vmatpush.msra.mxu0 %v993
    %v995 = vand.u32 %v722, 4294901760
    %v996 = vsub.f32 %v722, %v995
    %v997 = vand.u32 %v996, 4294901760
    %v998 = vsub.f32 %v996, %v997
    %v999 = vand.u32 %v998, 4294901760
    %1000 = vmatpush.msra.mxu0 %v999
    %v1001 = vand.u32 %v718, 4294901760
    %v1002 = vsub.f32 %v718, %v1001
    %v1003 = vand.u32 %v1002, 4294901760
    %v1004 = vsub.f32 %v1002, %v1003
    %v1005 = vand.u32 %v1004, 4294901760
    %1006 = vmatpush.msra.mxu0 %v1005
    %v1007 = vand.u32 %v714, 4294901760
    %v1008 = vsub.f32 %v714, %v1007
    %v1009 = vand.u32 %v1008, 4294901760
    %v1010 = vsub.f32 %v1008, %v1009
    %v1011 = vand.u32 %v1010, 4294901760
    %1012 = vmatpush.msra.mxu0 %v1011
    %v1013 = vand.u32 %v710, 4294901760
    %v1014 = vsub.f32 %v710, %v1013
    %v1015 = vand.u32 %v1014, 4294901760
    %v1016 = vsub.f32 %v1014, %v1015
    %v1017 = vand.u32 %v1016, 4294901760
    %1018 = vmatpush.msra.mxu0 %v1017
    %v1019 = vand.u32 %v706, 4294901760
    %v1020 = vsub.f32 %v706, %v1019
    %v1021 = vand.u32 %v1020, 4294901760
    %v1022 = vsub.f32 %v1020, %v1021
    %v1023 = vand.u32 %v1022, 4294901760
    %1024 = vmatpush.msra.mxu0 %v1023
    %v1025 = vand.u32 %v33, 4294901760
    %1026 = vmatmul.f32.gmra.mxu0 %v1025
    %v1027 = vpop.f32.mrf.mxu0
    %v1028 = vadd.f32 %v807, %v1027
    %v1029 = vand.u32 %v34, 4294901760
    %1030 = vmatmul.f32.gmra.mxu0 %v1029
    %v1031 = vpop.f32.mrf.mxu0
    %v1032 = vadd.f32 %v815, %v1031
    %v1033 = vand.u32 %v35, 4294901760
    %1034 = vmatmul.f32.gmra.mxu0 %v1033
    %v1035 = vpop.f32.mrf.mxu0
    %v1036 = vadd.f32 %v823, %v1035
    %v1037 = vand.u32 %v36, 4294901760
    %1038 = vmatmul.f32.gmra.mxu0 %v1037
    %v1039 = vpop.f32.mrf.mxu0
    %v1040 = vadd.f32 %v831, %v1039
    %v1041 = vand.u32 %v37, 4294901760
    %1042 = vmatmul.f32.gmra.mxu0 %v1041
    %v1043 = vpop.f32.mrf.mxu0
    %v1044 = vadd.f32 %v839, %v1043
    %v1045 = vand.u32 %v38, 4294901760
    %1046 = vmatmul.f32.gmra.mxu0 %v1045
    %v1047 = vpop.f32.mrf.mxu0
    %v1048 = vadd.f32 %v847, %v1047
    %v1049 = vand.u32 %v39, 4294901760
    %1050 = vmatmul.f32.gmra.mxu0 %v1049
    %v1051 = vpop.f32.mrf.mxu0
    %v1052 = vadd.f32 %v855, %v1051
    %v1053 = vand.u32 %v40, 4294901760
    %1054 = vmatmul.f32.gmra.mxu0 %v1053
    %v1055 = vpop.f32.mrf.mxu0
    %v1056 = vadd.f32 %v863, %v1055
    %v1057 = vand.u32 %v41, 4294901760
    %1058 = vmatmul.f32.gmra.mxu0 %v1057
    %v1059 = vpop.f32.mrf.mxu0
    %v1060 = vadd.f32 %v871, %v1059
    %v1061 = vand.u32 %v42, 4294901760
    %1062 = vmatmul.f32.gmra.mxu0 %v1061
    %v1063 = vpop.f32.mrf.mxu0
    %v1064 = vadd.f32 %v879, %v1063
    %v1065 = vand.u32 %v43, 4294901760
    %1066 = vmatmul.f32.gmra.mxu0 %v1065
    %v1067 = vpop.f32.mrf.mxu0
    %v1068 = vadd.f32 %v887, %v1067
    %v1069 = vand.u32 %v44, 4294901760
    %1070 = vmatmul.f32.gmra.mxu0 %v1069
    %v1071 = vpop.f32.mrf.mxu0
    %v1072 = vadd.f32 %v895, %v1071
    %v1073 = vand.u32 %v45, 4294901760
    %1074 = vmatmul.f32.gmra.mxu0 %v1073
    %v1075 = vpop.f32.mrf.mxu0
    %v1076 = vadd.f32 %v903, %v1075
    %v1077 = vand.u32 %v46, 4294901760
    %1078 = vmatmul.f32.gmra.mxu0 %v1077
    %v1079 = vpop.f32.mrf.mxu0
    %v1080 = vadd.f32 %v911, %v1079
    %v1081 = vand.u32 %v47, 4294901760
    %1082 = vmatmul.f32.gmra.mxu0 %v1081
    %v1083 = vpop.f32.mrf.mxu0
    %v1084 = vadd.f32 %v919, %v1083
    %v1085 = vand.u32 %v48, 4294901760
    %1086 = vmatmul.f32.gmra.mxu0 %v1085
    %v1087 = vpop.f32.mrf.mxu0
    %v1088 = vadd.f32 %v927, %v1087
    %1089 = vdwg.mxu0
    %v1090 = vand.u32 %v766, 4294901760
    %v1091 = vsub.f32 %v766, %v1090
    %1092 = vmatpush.msra.mxu0 %v1091
    %v1093 = vand.u32 %v762, 4294901760
    %v1094 = vsub.f32 %v762, %v1093
    %1095 = vmatpush.msra.mxu0 %v1094
    %v1096 = vand.u32 %v758, 4294901760
    %v1097 = vsub.f32 %v758, %v1096
    %1098 = vmatpush.msra.mxu0 %v1097
    %v1099 = vand.u32 %v754, 4294901760
    %v1100 = vsub.f32 %v754, %v1099
    %1101 = vmatpush.msra.mxu0 %v1100
    %v1102 = vand.u32 %v750, 4294901760
    %v1103 = vsub.f32 %v750, %v1102
    %1104 = vmatpush.msra.mxu0 %v1103
    %v1105 = vand.u32 %v746, 4294901760
    %v1106 = vsub.f32 %v746, %v1105
    %1107 = vmatpush.msra.mxu0 %v1106
    %v1108 = vand.u32 %v742, 4294901760
    %v1109 = vsub.f32 %v742, %v1108
    %1110 = vmatpush.msra.mxu0 %v1109
    %v1111 = vand.u32 %v738, 4294901760
    %v1112 = vsub.f32 %v738, %v1111
    %1113 = vmatpush.msra.mxu0 %v1112
    %v1114 = vand.u32 %v734, 4294901760
    %v1115 = vsub.f32 %v734, %v1114
    %1116 = vmatpush.msra.mxu0 %v1115
    %v1117 = vand.u32 %v730, 4294901760
    %v1118 = vsub.f32 %v730, %v1117
    %1119 = vmatpush.msra.mxu0 %v1118
    %v1120 = vand.u32 %v726, 4294901760
    %v1121 = vsub.f32 %v726, %v1120
    %1122 = vmatpush.msra.mxu0 %v1121
    %v1123 = vand.u32 %v722, 4294901760
    %v1124 = vsub.f32 %v722, %v1123
    %1125 = vmatpush.msra.mxu0 %v1124
    %v1126 = vand.u32 %v718, 4294901760
    %v1127 = vsub.f32 %v718, %v1126
    %1128 = vmatpush.msra.mxu0 %v1127
    %v1129 = vand.u32 %v714, 4294901760
    %v1130 = vsub.f32 %v714, %v1129
    %1131 = vmatpush.msra.mxu0 %v1130
    %v1132 = vand.u32 %v710, 4294901760
    %v1133 = vsub.f32 %v710, %v1132
    %1134 = vmatpush.msra.mxu0 %v1133
    %v1135 = vand.u32 %v706, 4294901760
    %v1136 = vsub.f32 %v706, %v1135
    %1137 = vmatpush.msra.mxu0 %v1136
    %v1138 = vand.u32 %v33, 4294901760
    %v1139 = vsub.f32 %v33, %v1138
    %1140 = vmatmul.f32.gmra.mxu0 %v1139
    %v1141 = vpop.f32.mrf.mxu0
    %v1142 = vadd.f32 %v1028, %v1141
    %v1143 = vand.u32 %v34, 4294901760
    %v1144 = vsub.f32 %v34, %v1143
    %1145 = vmatmul.f32.gmra.mxu0 %v1144
    %v1146 = vpop.f32.mrf.mxu0
    %v1147 = vadd.f32 %v1032, %v1146
    %v1148 = vand.u32 %v35, 4294901760
    %v1149 = vsub.f32 %v35, %v1148
    %1150 = vmatmul.f32.gmra.mxu0 %v1149
    %v1151 = vpop.f32.mrf.mxu0
    %v1152 = vadd.f32 %v1036, %v1151
    %v1153 = vand.u32 %v36, 4294901760
    %v1154 = vsub.f32 %v36, %v1153
    %1155 = vmatmul.f32.gmra.mxu0 %v1154
    %v1156 = vpop.f32.mrf.mxu0
    %v1157 = vadd.f32 %v1040, %v1156
    %v1158 = vand.u32 %v37, 4294901760
    %v1159 = vsub.f32 %v37, %v1158
    %1160 = vmatmul.f32.gmra.mxu0 %v1159
    %v1161 = vpop.f32.mrf.mxu0
    %v1162 = vadd.f32 %v1044, %v1161
    %v1163 = vand.u32 %v38, 4294901760
    %v1164 = vsub.f32 %v38, %v1163
    %1165 = vmatmul.f32.gmra.mxu0 %v1164
    %v1166 = vpop.f32.mrf.mxu0
    %v1167 = vadd.f32 %v1048, %v1166
    %v1168 = vand.u32 %v39, 4294901760
    %v1169 = vsub.f32 %v39, %v1168
    %1170 = vmatmul.f32.gmra.mxu0 %v1169
    %v1171 = vpop.f32.mrf.mxu0
    %v1172 = vadd.f32 %v1052, %v1171
    %v1173 = vand.u32 %v40, 4294901760
    %v1174 = vsub.f32 %v40, %v1173
    %1175 = vmatmul.f32.gmra.mxu0 %v1174
    %v1176 = vpop.f32.mrf.mxu0
    %v1177 = vadd.f32 %v1056, %v1176
    %v1178 = vand.u32 %v41, 4294901760
    %v1179 = vsub.f32 %v41, %v1178
    %1180 = vmatmul.f32.gmra.mxu0 %v1179
    %v1181 = vpop.f32.mrf.mxu0
    %v1182 = vadd.f32 %v1060, %v1181
    %v1183 = vand.u32 %v42, 4294901760
    %v1184 = vsub.f32 %v42, %v1183
    %1185 = vmatmul.f32.gmra.mxu0 %v1184
    %v1186 = vpop.f32.mrf.mxu0
    %v1187 = vadd.f32 %v1064, %v1186
    %v1188 = vand.u32 %v43, 4294901760
    %v1189 = vsub.f32 %v43, %v1188
    %1190 = vmatmul.f32.gmra.mxu0 %v1189
    %v1191 = vpop.f32.mrf.mxu0
    %v1192 = vadd.f32 %v1068, %v1191
    %v1193 = vand.u32 %v44, 4294901760
    %v1194 = vsub.f32 %v44, %v1193
    %1195 = vmatmul.f32.gmra.mxu0 %v1194
    %v1196 = vpop.f32.mrf.mxu0
    %v1197 = vadd.f32 %v1072, %v1196
    %v1198 = vand.u32 %v45, 4294901760
    %v1199 = vsub.f32 %v45, %v1198
    %1200 = vmatmul.f32.gmra.mxu0 %v1199
    %v1201 = vpop.f32.mrf.mxu0
    %v1202 = vadd.f32 %v1076, %v1201
    %v1203 = vand.u32 %v46, 4294901760
    %v1204 = vsub.f32 %v46, %v1203
    %1205 = vmatmul.f32.gmra.mxu0 %v1204
    %v1206 = vpop.f32.mrf.mxu0
    %v1207 = vadd.f32 %v1080, %v1206
    %v1208 = vand.u32 %v47, 4294901760
    %v1209 = vsub.f32 %v47, %v1208
    %1210 = vmatmul.f32.gmra.mxu0 %v1209
    %v1211 = vpop.f32.mrf.mxu0
    %v1212 = vadd.f32 %v1084, %v1211
    %v1213 = vand.u32 %v48, 4294901760
    %v1214 = vsub.f32 %v48, %v1213
    %1215 = vmatmul.f32.gmra.mxu0 %v1214
    %v1216 = vpop.f32.mrf.mxu0
    %v1217 = vadd.f32 %v1088, %v1216
    %1218 = vdwg.mxu0
    %v1219 = vand.u32 %v766, 4294901760
    %1220 = vmatpush.msra.mxu0 %v1219
    %v1221 = vand.u32 %v762, 4294901760
    %1222 = vmatpush.msra.mxu0 %v1221
    %v1223 = vand.u32 %v758, 4294901760
    %1224 = vmatpush.msra.mxu0 %v1223
    %v1225 = vand.u32 %v754, 4294901760
    %1226 = vmatpush.msra.mxu0 %v1225
    %v1227 = vand.u32 %v750, 4294901760
    %1228 = vmatpush.msra.mxu0 %v1227
    %v1229 = vand.u32 %v746, 4294901760
    %1230 = vmatpush.msra.mxu0 %v1229
    %v1231 = vand.u32 %v742, 4294901760
    %1232 = vmatpush.msra.mxu0 %v1231
    %v1233 = vand.u32 %v738, 4294901760
    %1234 = vmatpush.msra.mxu0 %v1233
    %v1235 = vand.u32 %v734, 4294901760
    %1236 = vmatpush.msra.mxu0 %v1235
    %v1237 = vand.u32 %v730, 4294901760
    %1238 = vmatpush.msra.mxu0 %v1237
    %v1239 = vand.u32 %v726, 4294901760
    %1240 = vmatpush.msra.mxu0 %v1239
    %v1241 = vand.u32 %v722, 4294901760
    %1242 = vmatpush.msra.mxu0 %v1241
    %v1243 = vand.u32 %v718, 4294901760
    %1244 = vmatpush.msra.mxu0 %v1243
    %v1245 = vand.u32 %v714, 4294901760
    %1246 = vmatpush.msra.mxu0 %v1245
    %v1247 = vand.u32 %v710, 4294901760
    %1248 = vmatpush.msra.mxu0 %v1247
    %v1249 = vand.u32 %v706, 4294901760
    %1250 = vmatpush.msra.mxu0 %v1249
    %v1251 = vand.u32 %v33, 4294901760
    %v1252 = vsub.f32 %v33, %v1251
    %v1253 = vand.u32 %v1252, 4294901760
    %1254 = vmatmul.f32.gmra.mxu0 %v1253
    %v1255 = vpop.f32.mrf.mxu0
    %v1256 = vadd.f32 %v1142, %v1255
    %v1257 = vand.u32 %v34, 4294901760
    %v1258 = vsub.f32 %v34, %v1257
    %v1259 = vand.u32 %v1258, 4294901760
    %1260 = vmatmul.f32.gmra.mxu0 %v1259
    %v1261 = vpop.f32.mrf.mxu0
    %v1262 = vadd.f32 %v1147, %v1261
    %v1263 = vand.u32 %v35, 4294901760
    %v1264 = vsub.f32 %v35, %v1263
    %v1265 = vand.u32 %v1264, 4294901760
    %1266 = vmatmul.f32.gmra.mxu0 %v1265
    %v1267 = vpop.f32.mrf.mxu0
    %v1268 = vadd.f32 %v1152, %v1267
    %v1269 = vand.u32 %v36, 4294901760
    %v1270 = vsub.f32 %v36, %v1269
    %v1271 = vand.u32 %v1270, 4294901760
    %1272 = vmatmul.f32.gmra.mxu0 %v1271
    %v1273 = vpop.f32.mrf.mxu0
    %v1274 = vadd.f32 %v1157, %v1273
    %v1275 = vand.u32 %v37, 4294901760
    %v1276 = vsub.f32 %v37, %v1275
    %v1277 = vand.u32 %v1276, 4294901760
    %1278 = vmatmul.f32.gmra.mxu0 %v1277
    %v1279 = vpop.f32.mrf.mxu0
    %v1280 = vadd.f32 %v1162, %v1279
    %v1281 = vand.u32 %v38, 4294901760
    %v1282 = vsub.f32 %v38, %v1281
    %v1283 = vand.u32 %v1282, 4294901760
    %1284 = vmatmul.f32.gmra.mxu0 %v1283
    %v1285 = vpop.f32.mrf.mxu0
    %v1286 = vadd.f32 %v1167, %v1285
    %v1287 = vand.u32 %v39, 4294901760
    %v1288 = vsub.f32 %v39, %v1287
    %v1289 = vand.u32 %v1288, 4294901760
    %1290 = vmatmul.f32.gmra.mxu0 %v1289
    %v1291 = vpop.f32.mrf.mxu0
    %v1292 = vadd.f32 %v1172, %v1291
    %v1293 = vand.u32 %v40, 4294901760
    %v1294 = vsub.f32 %v40, %v1293
    %v1295 = vand.u32 %v1294, 4294901760
    %1296 = vmatmul.f32.gmra.mxu0 %v1295
    %v1297 = vpop.f32.mrf.mxu0
    %v1298 = vadd.f32 %v1177, %v1297
    %v1299 = vand.u32 %v41, 4294901760
    %v1300 = vsub.f32 %v41, %v1299
    %v1301 = vand.u32 %v1300, 4294901760
    %1302 = vmatmul.f32.gmra.mxu0 %v1301
    %v1303 = vpop.f32.mrf.mxu0
    %v1304 = vadd.f32 %v1182, %v1303
    %v1305 = vand.u32 %v42, 4294901760
    %v1306 = vsub.f32 %v42, %v1305
    %v1307 = vand.u32 %v1306, 4294901760
    %1308 = vmatmul.f32.gmra.mxu0 %v1307
    %v1309 = vpop.f32.mrf.mxu0
    %v1310 = vadd.f32 %v1187, %v1309
    %v1311 = vand.u32 %v43, 4294901760
    %v1312 = vsub.f32 %v43, %v1311
    %v1313 = vand.u32 %v1312, 4294901760
    %1314 = vmatmul.f32.gmra.mxu0 %v1313
    %v1315 = vpop.f32.mrf.mxu0
    %v1316 = vadd.f32 %v1192, %v1315
    %v1317 = vand.u32 %v44, 4294901760
    %v1318 = vsub.f32 %v44, %v1317
    %v1319 = vand.u32 %v1318, 4294901760
    %1320 = vmatmul.f32.gmra.mxu0 %v1319
    %v1321 = vpop.f32.mrf.mxu0
    %v1322 = vadd.f32 %v1197, %v1321
    %v1323 = vand.u32 %v45, 4294901760
    %v1324 = vsub.f32 %v45, %v1323
    %v1325 = vand.u32 %v1324, 4294901760
    %1326 = vmatmul.f32.gmra.mxu0 %v1325
    %v1327 = vpop.f32.mrf.mxu0
    %v1328 = vadd.f32 %v1202, %v1327
    %v1329 = vand.u32 %v46, 4294901760
    %v1330 = vsub.f32 %v46, %v1329
    %v1331 = vand.u32 %v1330, 4294901760
    %1332 = vmatmul.f32.gmra.mxu0 %v1331
    %v1333 = vpop.f32.mrf.mxu0
    %v1334 = vadd.f32 %v1207, %v1333
    %v1335 = vand.u32 %v47, 4294901760
    %v1336 = vsub.f32 %v47, %v1335
    %v1337 = vand.u32 %v1336, 4294901760
    %1338 = vmatmul.f32.gmra.mxu0 %v1337
    %v1339 = vpop.f32.mrf.mxu0
    %v1340 = vadd.f32 %v1212, %v1339
    %v1341 = vand.u32 %v48, 4294901760
    %v1342 = vsub.f32 %v48, %v1341
    %v1343 = vand.u32 %v1342, 4294901760
    %1344 = vmatmul.f32.gmra.mxu0 %v1343
    %v1345 = vpop.f32.mrf.mxu0
    %v1346 = vadd.f32 %v1217, %v1345
    %1347 = vdwg.mxu0
    %v1348 = vand.u32 %v766, 4294901760
    %v1349 = vsub.f32 %v766, %v1348
    %v1350 = vand.u32 %v1349, 4294901760
    %1351 = vmatpush.msra.mxu0 %v1350
    %v1352 = vand.u32 %v762, 4294901760
    %v1353 = vsub.f32 %v762, %v1352
    %v1354 = vand.u32 %v1353, 4294901760
    %1355 = vmatpush.msra.mxu0 %v1354
    %v1356 = vand.u32 %v758, 4294901760
    %v1357 = vsub.f32 %v758, %v1356
    %v1358 = vand.u32 %v1357, 4294901760
    %1359 = vmatpush.msra.mxu0 %v1358
    %v1360 = vand.u32 %v754, 4294901760
    %v1361 = vsub.f32 %v754, %v1360
    %v1362 = vand.u32 %v1361, 4294901760
    %1363 = vmatpush.msra.mxu0 %v1362
    %v1364 = vand.u32 %v750, 4294901760
    %v1365 = vsub.f32 %v750, %v1364
    %v1366 = vand.u32 %v1365, 4294901760
    %1367 = vmatpush.msra.mxu0 %v1366
    %v1368 = vand.u32 %v746, 4294901760
    %v1369 = vsub.f32 %v746, %v1368
    %v1370 = vand.u32 %v1369, 4294901760
    %1371 = vmatpush.msra.mxu0 %v1370
    %v1372 = vand.u32 %v742, 4294901760
    %v1373 = vsub.f32 %v742, %v1372
    %v1374 = vand.u32 %v1373, 4294901760
    %1375 = vmatpush.msra.mxu0 %v1374
    %v1376 = vand.u32 %v738, 4294901760
    %v1377 = vsub.f32 %v738, %v1376
    %v1378 = vand.u32 %v1377, 4294901760
    %1379 = vmatpush.msra.mxu0 %v1378
    %v1380 = vand.u32 %v734, 4294901760
    %v1381 = vsub.f32 %v734, %v1380
    %v1382 = vand.u32 %v1381, 4294901760
    %1383 = vmatpush.msra.mxu0 %v1382
    %v1384 = vand.u32 %v730, 4294901760
    %v1385 = vsub.f32 %v730, %v1384
    %v1386 = vand.u32 %v1385, 4294901760
    %1387 = vmatpush.msra.mxu0 %v1386
    %v1388 = vand.u32 %v726, 4294901760
    %v1389 = vsub.f32 %v726, %v1388
    %v1390 = vand.u32 %v1389, 4294901760
    %1391 = vmatpush.msra.mxu0 %v1390
    %v1392 = vand.u32 %v722, 4294901760
    %v1393 = vsub.f32 %v722, %v1392
    %v1394 = vand.u32 %v1393, 4294901760
    %1395 = vmatpush.msra.mxu0 %v1394
    %v1396 = vand.u32 %v718, 4294901760
    %v1397 = vsub.f32 %v718, %v1396
    %v1398 = vand.u32 %v1397, 4294901760
    %1399 = vmatpush.msra.mxu0 %v1398
    %v1400 = vand.u32 %v714, 4294901760
    %v1401 = vsub.f32 %v714, %v1400
    %v1402 = vand.u32 %v1401, 4294901760
    %1403 = vmatpush.msra.mxu0 %v1402
    %v1404 = vand.u32 %v710, 4294901760
    %v1405 = vsub.f32 %v710, %v1404
    %v1406 = vand.u32 %v1405, 4294901760
    %1407 = vmatpush.msra.mxu0 %v1406
    %v1408 = vand.u32 %v706, 4294901760
    %v1409 = vsub.f32 %v706, %v1408
    %v1410 = vand.u32 %v1409, 4294901760
    %1411 = vmatpush.msra.mxu0 %v1410
    %v1412 = vand.u32 %v33, 4294901760
    %1413 = vmatmul.f32.gmra.mxu0 %v1412
    %v1414 = vpop.f32.mrf.mxu0
    %v1415 = vadd.f32 %v1256, %v1414
    %v1416 = vand.u32 %v34, 4294901760
    %1417 = vmatmul.f32.gmra.mxu0 %v1416
    %v1418 = vpop.f32.mrf.mxu0
    %v1419 = vadd.f32 %v1262, %v1418
    %v1420 = vand.u32 %v35, 4294901760
    %1421 = vmatmul.f32.gmra.mxu0 %v1420
    %v1422 = vpop.f32.mrf.mxu0
    %v1423 = vadd.f32 %v1268, %v1422
    %v1424 = vand.u32 %v36, 4294901760
    %1425 = vmatmul.f32.gmra.mxu0 %v1424
    %v1426 = vpop.f32.mrf.mxu0
    %v1427 = vadd.f32 %v1274, %v1426
    %v1428 = vand.u32 %v37, 4294901760
    %1429 = vmatmul.f32.gmra.mxu0 %v1428
    %v1430 = vpop.f32.mrf.mxu0
    %v1431 = vadd.f32 %v1280, %v1430
    %v1432 = vand.u32 %v38, 4294901760
    %1433 = vmatmul.f32.gmra.mxu0 %v1432
    %v1434 = vpop.f32.mrf.mxu0
    %v1435 = vadd.f32 %v1286, %v1434
    %v1436 = vand.u32 %v39, 4294901760
    %1437 = vmatmul.f32.gmra.mxu0 %v1436
    %v1438 = vpop.f32.mrf.mxu0
    %v1439 = vadd.f32 %v1292, %v1438
    %v1440 = vand.u32 %v40, 4294901760
    %1441 = vmatmul.f32.gmra.mxu0 %v1440
    %v1442 = vpop.f32.mrf.mxu0
    %v1443 = vadd.f32 %v1298, %v1442
    %v1444 = vand.u32 %v41, 4294901760
    %1445 = vmatmul.f32.gmra.mxu0 %v1444
    %v1446 = vpop.f32.mrf.mxu0
    %v1447 = vadd.f32 %v1304, %v1446
    %v1448 = vand.u32 %v42, 4294901760
    %1449 = vmatmul.f32.gmra.mxu0 %v1448
    %v1450 = vpop.f32.mrf.mxu0
    %v1451 = vadd.f32 %v1310, %v1450
    %v1452 = vand.u32 %v43, 4294901760
    %1453 = vmatmul.f32.gmra.mxu0 %v1452
    %v1454 = vpop.f32.mrf.mxu0
    %v1455 = vadd.f32 %v1316, %v1454
    %v1456 = vand.u32 %v44, 4294901760
    %1457 = vmatmul.f32.gmra.mxu0 %v1456
    %v1458 = vpop.f32.mrf.mxu0
    %v1459 = vadd.f32 %v1322, %v1458
    %v1460 = vand.u32 %v45, 4294901760
    %1461 = vmatmul.f32.gmra.mxu0 %v1460
    %v1462 = vpop.f32.mrf.mxu0
    %v1463 = vadd.f32 %v1328, %v1462
    %v1464 = vand.u32 %v46, 4294901760
    %1465 = vmatmul.f32.gmra.mxu0 %v1464
    %v1466 = vpop.f32.mrf.mxu0
    %v1467 = vadd.f32 %v1334, %v1466
    %v1468 = vand.u32 %v47, 4294901760
    %1469 = vmatmul.f32.gmra.mxu0 %v1468
    %v1470 = vpop.f32.mrf.mxu0
    %v1471 = vadd.f32 %v1340, %v1470
    %v1472 = vand.u32 %v48, 4294901760
    %1473 = vmatmul.f32.gmra.mxu0 %v1472
    %v1474 = vpop.f32.mrf.mxu0
    %v1475 = vadd.f32 %v1346, %v1474
    %1476 = vdwg.mxu0
    %v1477 = vand.u32 %v766, 4294901760
    %1478 = vmatpush.msra.mxu0 %v1477
    %v1479 = vand.u32 %v762, 4294901760
    %1480 = vmatpush.msra.mxu0 %v1479
    %v1481 = vand.u32 %v758, 4294901760
    %1482 = vmatpush.msra.mxu0 %v1481
    %v1483 = vand.u32 %v754, 4294901760
    %1484 = vmatpush.msra.mxu0 %v1483
    %v1485 = vand.u32 %v750, 4294901760
    %1486 = vmatpush.msra.mxu0 %v1485
    %v1487 = vand.u32 %v746, 4294901760
    %1488 = vmatpush.msra.mxu0 %v1487
    %v1489 = vand.u32 %v742, 4294901760
    %1490 = vmatpush.msra.mxu0 %v1489
    %v1491 = vand.u32 %v738, 4294901760
    %1492 = vmatpush.msra.mxu0 %v1491
    %v1493 = vand.u32 %v734, 4294901760
    %1494 = vmatpush.msra.mxu0 %v1493
    %v1495 = vand.u32 %v730, 4294901760
    %1496 = vmatpush.msra.mxu0 %v1495
    %v1497 = vand.u32 %v726, 4294901760
    %1498 = vmatpush.msra.mxu0 %v1497
    %v1499 = vand.u32 %v722, 4294901760
    %1500 = vmatpush.msra.mxu0 %v1499
    %v1501 = vand.u32 %v718, 4294901760
    %1502 = vmatpush.msra.mxu0 %v1501
    %v1503 = vand.u32 %v714, 4294901760
    %1504 = vmatpush.msra.mxu0 %v1503
    %v1505 = vand.u32 %v710, 4294901760
    %1506 = vmatpush.msra.mxu0 %v1505
    %v1507 = vand.u32 %v706, 4294901760
    %1508 = vmatpush.msra.mxu0 %v1507
    %v1509 = vand.u32 %v33, 4294901760
    %1510 = vmatmul.f32.gmra.mxu0 %v1509
    %v1511 = vpop.f32.mrf.mxu0
    %v1512 = vadd.f32 %v1415, %v1511
    %v1513 = vand.u32 %v34, 4294901760
    %1514 = vmatmul.f32.gmra.mxu0 %v1513
    %v1515 = vpop.f32.mrf.mxu0
    %v1516 = vadd.f32 %v1419, %v1515
    %v1517 = vand.u32 %v35, 4294901760
    %1518 = vmatmul.f32.gmra.mxu0 %v1517
    %v1519 = vpop.f32.mrf.mxu0
    %v1520 = vadd.f32 %v1423, %v1519
    %v1521 = vand.u32 %v36, 4294901760
    %1522 = vmatmul.f32.gmra.mxu0 %v1521
    %v1523 = vpop.f32.mrf.mxu0
    %v1524 = vadd.f32 %v1427, %v1523
    %v1525 = vand.u32 %v37, 4294901760
    %1526 = vmatmul.f32.gmra.mxu0 %v1525
    %v1527 = vpop.f32.mrf.mxu0
    %v1528 = vadd.f32 %v1431, %v1527
    %v1529 = vand.u32 %v38, 4294901760
    %1530 = vmatmul.f32.gmra.mxu0 %v1529
    %v1531 = vpop.f32.mrf.mxu0
    %v1532 = vadd.f32 %v1435, %v1531
    %v1533 = vand.u32 %v39, 4294901760
    %1534 = vmatmul.f32.gmra.mxu0 %v1533
    %v1535 = vpop.f32.mrf.mxu0
    %v1536 = vadd.f32 %v1439, %v1535
    %v1537 = vand.u32 %v40, 4294901760
    %1538 = vmatmul.f32.gmra.mxu0 %v1537
    %v1539 = vpop.f32.mrf.mxu0
    %v1540 = vadd.f32 %v1443, %v1539
    %v1541 = vand.u32 %v41, 4294901760
    %1542 = vmatmul.f32.gmra.mxu0 %v1541
    %v1543 = vpop.f32.mrf.mxu0
    %v1544 = vadd.f32 %v1447, %v1543
    %v1545 = vand.u32 %v42, 4294901760
    %1546 = vmatmul.f32.gmra.mxu0 %v1545
    %v1547 = vpop.f32.mrf.mxu0
    %v1548 = vadd.f32 %v1451, %v1547
    %v1549 = vand.u32 %v43, 4294901760
    %1550 = vmatmul.f32.gmra.mxu0 %v1549
    %v1551 = vpop.f32.mrf.mxu0
    %v1552 = vadd.f32 %v1455, %v1551
    %v1553 = vand.u32 %v44, 4294901760
    %1554 = vmatmul.f32.gmra.mxu0 %v1553
    %v1555 = vpop.f32.mrf.mxu0
    %v1556 = vadd.f32 %v1459, %v1555
    %v1557 = vand.u32 %v45, 4294901760
    %1558 = vmatmul.f32.gmra.mxu0 %v1557
    %v1559 = vpop.f32.mrf.mxu0
    %v1560 = vadd.f32 %v1463, %v1559
    %v1561 = vand.u32 %v46, 4294901760
    %1562 = vmatmul.f32.gmra.mxu0 %v1561
    %v1563 = vpop.f32.mrf.mxu0
    %v1564 = vadd.f32 %v1467, %v1563
    %v1565 = vand.u32 %v47, 4294901760
    %1566 = vmatmul.f32.gmra.mxu0 %v1565
    %v1567 = vpop.f32.mrf.mxu0
    %v1568 = vadd.f32 %v1471, %v1567
    %v1569 = vand.u32 %v48, 4294901760
    %1570 = vmatmul.f32.gmra.mxu0 %v1569
    %v1571 = vpop.f32.mrf.mxu0
    %v1572 = vadd.f32 %v1475, %v1571
    %1573 = vdwg.mxu0
    %v1574 = vmax.f32 %v1512, 0.0
    %v1575 = vmax.f32 %v1516, 0.0
    %v1576 = vmax.f32 %v1520, 0.0
    %v1577 = vmax.f32 %v1524, 0.0
    %v1578 = vmax.f32 %v1528, 0.0
    %v1579 = vmax.f32 %v1532, 0.0
    %v1580 = vmax.f32 %v1536, 0.0
    %v1581 = vmax.f32 %v1540, 0.0
    %v1582 = vmax.f32 %v1544, 0.0
    %v1583 = vmax.f32 %v1548, 0.0
    %v1584 = vmax.f32 %v1552, 0.0
    %v1585 = vmax.f32 %v1556, 0.0
    %v1586 = vmax.f32 %v1560, 0.0
    %v1587 = vmax.f32 %v1564, 0.0
    %v1588 = vmax.f32 %v1568, 0.0
    %v1589 = vmax.f32 %v1572, 0.0
    %v1590 = vld [vmem:[#allocation2] sm:$0xff]
    %v1591 = vld [vmem:[#allocation2 + $0x8] sm:$0xff]
    %v1592 = vld [vmem:[#allocation2 + $0x10] sm:$0xff]
    %v1593 = vld [vmem:[#allocation2 + $0x18] sm:$0xff]
    %v1594 = vld [vmem:[#allocation2 + $0x20] sm:$0xff]
    %v1595 = vld [vmem:[#allocation2 + $0x28] sm:$0xff]
    %v1596 = vld [vmem:[#allocation2 + $0x30] sm:$0xff]
    %v1597 = vld [vmem:[#allocation2 + $0x38] sm:$0xff]
    %vm1598 = vcmask 523264
    %v1600 = vsel %vm1598, %v1574, 0
    %v1603 = vsel %vm1598, %v1575, 0
    %v1606 = vsel %vm1598, %v1576, 0
    %v1609 = vsel %vm1598, %v1577, 0
    %v1612 = vsel %vm1598, %v1578, 0
    %v1615 = vsel %vm1598, %v1579, 0
    %v1618 = vsel %vm1598, %v1580, 0
    %v1621 = vsel %vm1598, %v1581, 0
    %v1624 = vsel %vm1598, %v1582, 0
    %v1627 = vsel %vm1598, %v1583, 0
    %v1630 = vsel %vm1598, %v1584, 0
    %v1633 = vsel %vm1598, %v1585, 0
    %v1636 = vsel %vm1598, %v1586, 0
    %v1639 = vsel %vm1598, %v1587, 0
    %v1642 = vsel %vm1598, %v1588, 0
    %v1645 = vsel %vm1598, %v1589, 0
    %1647 = vmatpush.msra.mxu0 0.0
    %1648 = vmatpush.msra.mxu0 0.0
    %1649 = vmatpush.msra.mxu0 0.0
    %1650 = vmatpush.msra.mxu0 0.0
    %1651 = vmatpush.msra.mxu0 0.0
    %1652 = vmatpush.msra.mxu0 0.0
    %1653 = vmatpush.msra.mxu0 0.0
    %1654 = vmatpush.msra.mxu0 0.0
    %v1655 = vand.u32 %v1597, 4294901760
    %1656 = vmatpush.msra.mxu0 %v1655
    %v1657 = vand.u32 %v1596, 4294901760
    %1658 = vmatpush.msra.mxu0 %v1657
    %v1659 = vand.u32 %v1595, 4294901760
    %1660 = vmatpush.msra.mxu0 %v1659
    %v1661 = vand.u32 %v1594, 4294901760
    %1662 = vmatpush.msra.mxu0 %v1661
    %v1663 = vand.u32 %v1593, 4294901760
    %1664 = vmatpush.msra.mxu0 %v1663
    %v1665 = vand.u32 %v1592, 4294901760
    %1666 = vmatpush.msra.mxu0 %v1665
    %v1667 = vand.u32 %v1591, 4294901760
    %1668 = vmatpush.msra.mxu0 %v1667
    %v1669 = vand.u32 %v1590, 4294901760
    %1670 = vmatpush.msra.mxu0 %v1669
    %v1671 = vand.u32 %v1600, 4294901760
    %v1672 = vsub.f32 %v1600, %v1671
    %v1673 = vand.u32 %v1672, 4294901760
    %v1674 = vsub.f32 %v1672, %v1673
    %v1675 = vand.u32 %v1674, 4294901760
    %1676 = vmatmul.f32.gmra.mxu0 %v1675
    %v1677 = vpop.f32.mrf.mxu0
    %v1678 = vadd.f32 0.0, %v1677
    %v1679 = vand.u32 %v1603, 4294901760
    %v1680 = vsub.f32 %v1603, %v1679
    %v1681 = vand.u32 %v1680, 4294901760
    %v1682 = vsub.f32 %v1680, %v1681
    %v1683 = vand.u32 %v1682, 4294901760
    %1684 = vmatmul.f32.gmra.mxu0 %v1683
    %v1685 = vpop.f32.mrf.mxu0
    %v1686 = vadd.f32 0.0, %v1685
    %v1687 = vand.u32 %v1606, 4294901760
    %v1688 = vsub.f32 %v1606, %v1687
    %v1689 = vand.u32 %v1688, 4294901760
    %v1690 = vsub.f32 %v1688, %v1689
    %v1691 = vand.u32 %v1690, 4294901760
    %1692 = vmatmul.f32.gmra.mxu0 %v1691
    %v1693 = vpop.f32.mrf.mxu0
    %v1694 = vadd.f32 0.0, %v1693
    %v1695 = vand.u32 %v1609, 4294901760
    %v1696 = vsub.f32 %v1609, %v1695
    %v1697 = vand.u32 %v1696, 4294901760
    %v1698 = vsub.f32 %v1696, %v1697
    %v1699 = vand.u32 %v1698, 4294901760
    %1700 = vmatmul.f32.gmra.mxu0 %v1699
    %v1701 = vpop.f32.mrf.mxu0
    %v1702 = vadd.f32 0.0, %v1701
    %v1703 = vand.u32 %v1612, 4294901760
    %v1704 = vsub.f32 %v1612, %v1703
    %v1705 = vand.u32 %v1704, 4294901760
    %v1706 = vsub.f32 %v1704, %v1705
    %v1707 = vand.u32 %v1706, 4294901760
    %1708 = vmatmul.f32.gmra.mxu0 %v1707
    %v1709 = vpop.f32.mrf.mxu0
    %v1710 = vadd.f32 0.0, %v1709
    %v1711 = vand.u32 %v1615, 4294901760
    %v1712 = vsub.f32 %v1615, %v1711
    %v1713 = vand.u32 %v1712, 4294901760
    %v1714 = vsub.f32 %v1712, %v1713
    %v1715 = vand.u32 %v1714, 4294901760
    %1716 = vmatmul.f32.gmra.mxu0 %v1715
    %v1717 = vpop.f32.mrf.mxu0
    %v1718 = vadd.f32 0.0, %v1717
    %v1719 = vand.u32 %v1618, 4294901760
    %v1720 = vsub.f32 %v1618, %v1719
    %v1721 = vand.u32 %v1720, 4294901760
    %v1722 = vsub.f32 %v1720, %v1721
    %v1723 = vand.u32 %v1722, 4294901760
    %1724 = vmatmul.f32.gmra.mxu0 %v1723
    %v1725 = vpop.f32.mrf.mxu0
    %v1726 = vadd.f32 0.0, %v1725
    %v1727 = vand.u32 %v1621, 4294901760
    %v1728 = vsub.f32 %v1621, %v1727
    %v1729 = vand.u32 %v1728, 4294901760
    %v1730 = vsub.f32 %v1728, %v1729
    %v1731 = vand.u32 %v1730, 4294901760
    %1732 = vmatmul.f32.gmra.mxu0 %v1731
    %v1733 = vpop.f32.mrf.mxu0
    %v1734 = vadd.f32 0.0, %v1733
    %v1735 = vand.u32 %v1624, 4294901760
    %v1736 = vsub.f32 %v1624, %v1735
    %v1737 = vand.u32 %v1736, 4294901760
    %v1738 = vsub.f32 %v1736, %v1737
    %v1739 = vand.u32 %v1738, 4294901760
    %1740 = vmatmul.f32.gmra.mxu0 %v1739
    %v1741 = vpop.f32.mrf.mxu0
    %v1742 = vadd.f32 0.0, %v1741
    %v1743 = vand.u32 %v1627, 4294901760
    %v1744 = vsub.f32 %v1627, %v1743
    %v1745 = vand.u32 %v1744, 4294901760
    %v1746 = vsub.f32 %v1744, %v1745
    %v1747 = vand.u32 %v1746, 4294901760
    %1748 = vmatmul.f32.gmra.mxu0 %v1747
    %v1749 = vpop.f32.mrf.mxu0
    %v1750 = vadd.f32 0.0, %v1749
    %v1751 = vand.u32 %v1630, 4294901760
    %v1752 = vsub.f32 %v1630, %v1751
    %v1753 = vand.u32 %v1752, 4294901760
    %v1754 = vsub.f32 %v1752, %v1753
    %v1755 = vand.u32 %v1754, 4294901760
    %1756 = vmatmul.f32.gmra.mxu0 %v1755
    %v1757 = vpop.f32.mrf.mxu0
    %v1758 = vadd.f32 0.0, %v1757
    %v1759 = vand.u32 %v1633, 4294901760
    %v1760 = vsub.f32 %v1633, %v1759
    %v1761 = vand.u32 %v1760, 4294901760
    %v1762 = vsub.f32 %v1760, %v1761
    %v1763 = vand.u32 %v1762, 4294901760
    %1764 = vmatmul.f32.gmra.mxu0 %v1763
    %v1765 = vpop.f32.mrf.mxu0
    %v1766 = vadd.f32 0.0, %v1765
    %v1767 = vand.u32 %v1636, 4294901760
    %v1768 = vsub.f32 %v1636, %v1767
    %v1769 = vand.u32 %v1768, 4294901760
    %v1770 = vsub.f32 %v1768, %v1769
    %v1771 = vand.u32 %v1770, 4294901760
    %1772 = vmatmul.f32.gmra.mxu0 %v1771
    %v1773 = vpop.f32.mrf.mxu0
    %v1774 = vadd.f32 0.0, %v1773
    %v1775 = vand.u32 %v1639, 4294901760
    %v1776 = vsub.f32 %v1639, %v1775
    %v1777 = vand.u32 %v1776, 4294901760
    %v1778 = vsub.f32 %v1776, %v1777
    %v1779 = vand.u32 %v1778, 4294901760
    %1780 = vmatmul.f32.gmra.mxu0 %v1779
    %v1781 = vpop.f32.mrf.mxu0
    %v1782 = vadd.f32 0.0, %v1781
    %v1783 = vand.u32 %v1642, 4294901760
    %v1784 = vsub.f32 %v1642, %v1783
    %v1785 = vand.u32 %v1784, 4294901760
    %v1786 = vsub.f32 %v1784, %v1785
    %v1787 = vand.u32 %v1786, 4294901760
    %1788 = vmatmul.f32.gmra.mxu0 %v1787
    %v1789 = vpop.f32.mrf.mxu0
    %v1790 = vadd.f32 0.0, %v1789
    %v1791 = vand.u32 %v1645, 4294901760
    %v1792 = vsub.f32 %v1645, %v1791
    %v1793 = vand.u32 %v1792, 4294901760
    %v1794 = vsub.f32 %v1792, %v1793
    %v1795 = vand.u32 %v1794, 4294901760
    %1796 = vmatmul.f32.gmra.mxu0 %v1795
    %v1797 = vpop.f32.mrf.mxu0
    %v1798 = vadd.f32 0.0, %v1797
    %1799 = vdwg.mxu0
    %1800 = vmatpush.msra.mxu0 0.0
    %1801 = vmatpush.msra.mxu0 0.0
    %1802 = vmatpush.msra.mxu0 0.0
    %1803 = vmatpush.msra.mxu0 0.0
    %1804 = vmatpush.msra.mxu0 0.0
    %1805 = vmatpush.msra.mxu0 0.0
    %1806 = vmatpush.msra.mxu0 0.0
    %1807 = vmatpush.msra.mxu0 0.0
    %v1808 = vand.u32 %v1597, 4294901760
    %v1809 = vsub.f32 %v1597, %v1808
    %v1810 = vand.u32 %v1809, 4294901760
    %v1811 = vsub.f32 %v1809, %v1810
    %v1812 = vand.u32 %v1811, 4294901760
    %1813 = vmatpush.msra.mxu0 %v1812
    %v1814 = vand.u32 %v1596, 4294901760
    %v1815 = vsub.f32 %v1596, %v1814
    %v1816 = vand.u32 %v1815, 4294901760
    %v1817 = vsub.f32 %v1815, %v1816
    %v1818 = vand.u32 %v1817, 4294901760
    %1819 = vmatpush.msra.mxu0 %v1818
    %v1820 = vand.u32 %v1595, 4294901760
    %v1821 = vsub.f32 %v1595, %v1820
    %v1822 = vand.u32 %v1821, 4294901760
    %v1823 = vsub.f32 %v1821, %v1822
    %v1824 = vand.u32 %v1823, 4294901760
    %1825 = vmatpush.msra.mxu0 %v1824
    %v1826 = vand.u32 %v1594, 4294901760
    %v1827 = vsub.f32 %v1594, %v1826
    %v1828 = vand.u32 %v1827, 4294901760
    %v1829 = vsub.f32 %v1827, %v1828
    %v1830 = vand.u32 %v1829, 4294901760
    %1831 = vmatpush.msra.mxu0 %v1830
    %v1832 = vand.u32 %v1593, 4294901760
    %v1833 = vsub.f32 %v1593, %v1832
    %v1834 = vand.u32 %v1833, 4294901760
    %v1835 = vsub.f32 %v1833, %v1834
    %v1836 = vand.u32 %v1835, 4294901760
    %1837 = vmatpush.msra.mxu0 %v1836
    %v1838 = vand.u32 %v1592, 4294901760
    %v1839 = vsub.f32 %v1592, %v1838
    %v1840 = vand.u32 %v1839, 4294901760
    %v1841 = vsub.f32 %v1839, %v1840
    %v1842 = vand.u32 %v1841, 4294901760
    %1843 = vmatpush.msra.mxu0 %v1842
    %v1844 = vand.u32 %v1591, 4294901760
    %v1845 = vsub.f32 %v1591, %v1844
    %v1846 = vand.u32 %v1845, 4294901760
    %v1847 = vsub.f32 %v1845, %v1846
    %v1848 = vand.u32 %v1847, 4294901760
    %1849 = vmatpush.msra.mxu0 %v1848
    %v1850 = vand.u32 %v1590, 4294901760
    %v1851 = vsub.f32 %v1590, %v1850
    %v1852 = vand.u32 %v1851, 4294901760
    %v1853 = vsub.f32 %v1851, %v1852
    %v1854 = vand.u32 %v1853, 4294901760
    %1855 = vmatpush.msra.mxu0 %v1854
    %v1856 = vand.u32 %v1600, 4294901760
    %1857 = vmatmul.f32.gmra.mxu0 %v1856
    %v1858 = vpop.f32.mrf.mxu0
    %v1859 = vadd.f32 %v1678, %v1858
    %v1860 = vand.u32 %v1603, 4294901760
    %1861 = vmatmul.f32.gmra.mxu0 %v1860
    %v1862 = vpop.f32.mrf.mxu0
    %v1863 = vadd.f32 %v1686, %v1862
    %v1864 = vand.u32 %v1606, 4294901760
    %1865 = vmatmul.f32.gmra.mxu0 %v1864
    %v1866 = vpop.f32.mrf.mxu0
    %v1867 = vadd.f32 %v1694, %v1866
    %v1868 = vand.u32 %v1609, 4294901760
    %1869 = vmatmul.f32.gmra.mxu0 %v1868
    %v1870 = vpop.f32.mrf.mxu0
    %v1871 = vadd.f32 %v1702, %v1870
    %v1872 = vand.u32 %v1612, 4294901760
    %1873 = vmatmul.f32.gmra.mxu0 %v1872
    %v1874 = vpop.f32.mrf.mxu0
    %v1875 = vadd.f32 %v1710, %v1874
    %v1876 = vand.u32 %v1615, 4294901760
    %1877 = vmatmul.f32.gmra.mxu0 %v1876
    %v1878 = vpop.f32.mrf.mxu0
    %v1879 = vadd.f32 %v1718, %v1878
    %v1880 = vand.u32 %v1618, 4294901760
    %1881 = vmatmul.f32.gmra.mxu0 %v1880
    %v1882 = vpop.f32.mrf.mxu0
    %v1883 = vadd.f32 %v1726, %v1882
    %v1884 = vand.u32 %v1621, 4294901760
    %1885 = vmatmul.f32.gmra.mxu0 %v1884
    %v1886 = vpop.f32.mrf.mxu0
    %v1887 = vadd.f32 %v1734, %v1886
    %v1888 = vand.u32 %v1624, 4294901760
    %1889 = vmatmul.f32.gmra.mxu0 %v1888
    %v1890 = vpop.f32.mrf.mxu0
    %v1891 = vadd.f32 %v1742, %v1890
    %v1892 = vand.u32 %v1627, 4294901760
    %1893 = vmatmul.f32.gmra.mxu0 %v1892
    %v1894 = vpop.f32.mrf.mxu0
    %v1895 = vadd.f32 %v1750, %v1894
    %v1896 = vand.u32 %v1630, 4294901760
    %1897 = vmatmul.f32.gmra.mxu0 %v1896
    %v1898 = vpop.f32.mrf.mxu0
    %v1899 = vadd.f32 %v1758, %v1898
    %v1900 = vand.u32 %v1633, 4294901760
    %1901 = vmatmul.f32.gmra.mxu0 %v1900
    %v1902 = vpop.f32.mrf.mxu0
    %v1903 = vadd.f32 %v1766, %v1902
    %v1904 = vand.u32 %v1636, 4294901760
    %1905 = vmatmul.f32.gmra.mxu0 %v1904
    %v1906 = vpop.f32.mrf.mxu0
    %v1907 = vadd.f32 %v1774, %v1906
    %v1908 = vand.u32 %v1639, 4294901760
    %1909 = vmatmul.f32.gmra.mxu0 %v1908
    %v1910 = vpop.f32.mrf.mxu0
    %v1911 = vadd.f32 %v1782, %v1910
    %v1912 = vand.u32 %v1642, 4294901760
    %1913 = vmatmul.f32.gmra.mxu0 %v1912
    %v1914 = vpop.f32.mrf.mxu0
    %v1915 = vadd.f32 %v1790, %v1914
    %v1916 = vand.u32 %v1645, 4294901760
    %1917 = vmatmul.f32.gmra.mxu0 %v1916
    %v1918 = vpop.f32.mrf.mxu0
    %v1919 = vadd.f32 %v1798, %v1918
    %1920 = vdwg.mxu0
    %1921 = vmatpush.msra.mxu0 0.0
    %1922 = vmatpush.msra.mxu0 0.0
    %1923 = vmatpush.msra.mxu0 0.0
    %1924 = vmatpush.msra.mxu0 0.0
    %1925 = vmatpush.msra.mxu0 0.0
    %1926 = vmatpush.msra.mxu0 0.0
    %1927 = vmatpush.msra.mxu0 0.0
    %1928 = vmatpush.msra.mxu0 0.0
    %v1929 = vand.u32 %v1597, 4294901760
    %v1930 = vsub.f32 %v1597, %v1929
    %1931 = vmatpush.msra.mxu0 %v1930
    %v1932 = vand.u32 %v1596, 4294901760
    %v1933 = vsub.f32 %v1596, %v1932
    %1934 = vmatpush.msra.mxu0 %v1933
    %v1935 = vand.u32 %v1595, 4294901760
    %v1936 = vsub.f32 %v1595, %v1935
    %1937 = vmatpush.msra.mxu0 %v1936
    %v1938 = vand.u32 %v1594, 4294901760
    %v1939 = vsub.f32 %v1594, %v1938
    %1940 = vmatpush.msra.mxu0 %v1939
    %v1941 = vand.u32 %v1593, 4294901760
    %v1942 = vsub.f32 %v1593, %v1941
    %1943 = vmatpush.msra.mxu0 %v1942
    %v1944 = vand.u32 %v1592, 4294901760
    %v1945 = vsub.f32 %v1592, %v1944
    %1946 = vmatpush.msra.mxu0 %v1945
    %v1947 = vand.u32 %v1591, 4294901760
    %v1948 = vsub.f32 %v1591, %v1947
    %1949 = vmatpush.msra.mxu0 %v1948
    %v1950 = vand.u32 %v1590, 4294901760
    %v1951 = vsub.f32 %v1590, %v1950
    %1952 = vmatpush.msra.mxu0 %v1951
    %v1953 = vand.u32 %v1600, 4294901760
    %v1954 = vsub.f32 %v1600, %v1953
    %1955 = vmatmul.f32.gmra.mxu0 %v1954
    %v1956 = vpop.f32.mrf.mxu0
    %v1957 = vadd.f32 %v1859, %v1956
    %v1958 = vand.u32 %v1603, 4294901760
    %v1959 = vsub.f32 %v1603, %v1958
    %1960 = vmatmul.f32.gmra.mxu0 %v1959
    %v1961 = vpop.f32.mrf.mxu0
    %v1962 = vadd.f32 %v1863, %v1961
    %v1963 = vand.u32 %v1606, 4294901760
    %v1964 = vsub.f32 %v1606, %v1963
    %1965 = vmatmul.f32.gmra.mxu0 %v1964
    %v1966 = vpop.f32.mrf.mxu0
    %v1967 = vadd.f32 %v1867, %v1966
    %v1968 = vand.u32 %v1609, 4294901760
    %v1969 = vsub.f32 %v1609, %v1968
    %1970 = vmatmul.f32.gmra.mxu0 %v1969
    %v1971 = vpop.f32.mrf.mxu0
    %v1972 = vadd.f32 %v1871, %v1971
    %v1973 = vand.u32 %v1612, 4294901760
    %v1974 = vsub.f32 %v1612, %v1973
    %1975 = vmatmul.f32.gmra.mxu0 %v1974
    %v1976 = vpop.f32.mrf.mxu0
    %v1977 = vadd.f32 %v1875, %v1976
    %v1978 = vand.u32 %v1615, 4294901760
    %v1979 = vsub.f32 %v1615, %v1978
    %1980 = vmatmul.f32.gmra.mxu0 %v1979
    %v1981 = vpop.f32.mrf.mxu0
    %v1982 = vadd.f32 %v1879, %v1981
    %v1983 = vand.u32 %v1618, 4294901760
    %v1984 = vsub.f32 %v1618, %v1983
    %1985 = vmatmul.f32.gmra.mxu0 %v1984
    %v1986 = vpop.f32.mrf.mxu0
    %v1987 = vadd.f32 %v1883, %v1986
    %v1988 = vand.u32 %v1621, 4294901760
    %v1989 = vsub.f32 %v1621, %v1988
    %1990 = vmatmul.f32.gmra.mxu0 %v1989
    %v1991 = vpop.f32.mrf.mxu0
    %v1992 = vadd.f32 %v1887, %v1991
    %v1993 = vand.u32 %v1624, 4294901760
    %v1994 = vsub.f32 %v1624, %v1993
    %1995 = vmatmul.f32.gmra.mxu0 %v1994
    %v1996 = vpop.f32.mrf.mxu0
    %v1997 = vadd.f32 %v1891, %v1996
    %v1998 = vand.u32 %v1627, 4294901760
    %v1999 = vsub.f32 %v1627, %v1998
    %2000 = vmatmul.f32.gmra.mxu0 %v1999
    %v2001 = vpop.f32.mrf.mxu0
    %v2002 = vadd.f32 %v1895, %v2001
    %v2003 = vand.u32 %v1630, 4294901760
    %v2004 = vsub.f32 %v1630, %v2003
    %2005 = vmatmul.f32.gmra.mxu0 %v2004
    %v2006 = vpop.f32.mrf.mxu0
    %v2007 = vadd.f32 %v1899, %v2006
    %v2008 = vand.u32 %v1633, 4294901760
    %v2009 = vsub.f32 %v1633, %v2008
    %2010 = vmatmul.f32.gmra.mxu0 %v2009
    %v2011 = vpop.f32.mrf.mxu0
    %v2012 = vadd.f32 %v1903, %v2011
    %v2013 = vand.u32 %v1636, 4294901760
    %v2014 = vsub.f32 %v1636, %v2013
    %2015 = vmatmul.f32.gmra.mxu0 %v2014
    %v2016 = vpop.f32.mrf.mxu0
    %v2017 = vadd.f32 %v1907, %v2016
    %v2018 = vand.u32 %v1639, 4294901760
    %v2019 = vsub.f32 %v1639, %v2018
    %2020 = vmatmul.f32.gmra.mxu0 %v2019
    %v2021 = vpop.f32.mrf.mxu0
    %v2022 = vadd.f32 %v1911, %v2021
    %v2023 = vand.u32 %v1642, 4294901760
    %v2024 = vsub.f32 %v1642, %v2023
    %2025 = vmatmul.f32.gmra.mxu0 %v2024
    %v2026 = vpop.f32.mrf.mxu0
    %v2027 = vadd.f32 %v1915, %v2026
    %v2028 = vand.u32 %v1645, 4294901760
    %v2029 = vsub.f32 %v1645, %v2028
    %2030 = vmatmul.f32.gmra.mxu0 %v2029
    %v2031 = vpop.f32.mrf.mxu0
    %v2032 = vadd.f32 %v1919, %v2031
    %2033 = vdwg.mxu0
    %2034 = vmatpush.msra.mxu0 0.0
    %2035 = vmatpush.msra.mxu0 0.0
    %2036 = vmatpush.msra.mxu0 0.0
    %2037 = vmatpush.msra.mxu0 0.0
    %2038 = vmatpush.msra.mxu0 0.0
    %2039 = vmatpush.msra.mxu0 0.0
    %2040 = vmatpush.msra.mxu0 0.0
    %2041 = vmatpush.msra.mxu0 0.0
    %v2042 = vand.u32 %v1597, 4294901760
    %2043 = vmatpush.msra.mxu0 %v2042
    %v2044 = vand.u32 %v1596, 4294901760
    %2045 = vmatpush.msra.mxu0 %v2044
    %v2046 = vand.u32 %v1595, 4294901760
    %2047 = vmatpush.msra.mxu0 %v2046
    %v2048 = vand.u32 %v1594, 4294901760
    %2049 = vmatpush.msra.mxu0 %v2048
    %v2050 = vand.u32 %v1593, 4294901760
    %2051 = vmatpush.msra.mxu0 %v2050
    %v2052 = vand.u32 %v1592, 4294901760
    %2053 = vmatpush.msra.mxu0 %v2052
    %v2054 = vand.u32 %v1591, 4294901760
    %2055 = vmatpush.msra.mxu0 %v2054
    %v2056 = vand.u32 %v1590, 4294901760
    %2057 = vmatpush.msra.mxu0 %v2056
    %v2058 = vand.u32 %v1600, 4294901760
    %v2059 = vsub.f32 %v1600, %v2058
    %v2060 = vand.u32 %v2059, 4294901760
    %2061 = vmatmul.f32.gmra.mxu0 %v2060
    %v2062 = vpop.f32.mrf.mxu0
    %v2063 = vadd.f32 %v1957, %v2062
    %v2064 = vand.u32 %v1603, 4294901760
    %v2065 = vsub.f32 %v1603, %v2064
    %v2066 = vand.u32 %v2065, 4294901760
    %2067 = vmatmul.f32.gmra.mxu0 %v2066
    %v2068 = vpop.f32.mrf.mxu0
    %v2069 = vadd.f32 %v1962, %v2068
    %v2070 = vand.u32 %v1606, 4294901760
    %v2071 = vsub.f32 %v1606, %v2070
    %v2072 = vand.u32 %v2071, 4294901760
    %2073 = vmatmul.f32.gmra.mxu0 %v2072
    %v2074 = vpop.f32.mrf.mxu0
    %v2075 = vadd.f32 %v1967, %v2074
    %v2076 = vand.u32 %v1609, 4294901760
    %v2077 = vsub.f32 %v1609, %v2076
    %v2078 = vand.u32 %v2077, 4294901760
    %2079 = vmatmul.f32.gmra.mxu0 %v2078
    %v2080 = vpop.f32.mrf.mxu0
    %v2081 = vadd.f32 %v1972, %v2080
    %v2082 = vand.u32 %v1612, 4294901760
    %v2083 = vsub.f32 %v1612, %v2082
    %v2084 = vand.u32 %v2083, 4294901760
    %2085 = vmatmul.f32.gmra.mxu0 %v2084
    %v2086 = vpop.f32.mrf.mxu0
    %v2087 = vadd.f32 %v1977, %v2086
    %v2088 = vand.u32 %v1615, 4294901760
    %v2089 = vsub.f32 %v1615, %v2088
    %v2090 = vand.u32 %v2089, 4294901760
    %2091 = vmatmul.f32.gmra.mxu0 %v2090
    %v2092 = vpop.f32.mrf.mxu0
    %v2093 = vadd.f32 %v1982, %v2092
    %v2094 = vand.u32 %v1618, 4294901760
    %v2095 = vsub.f32 %v1618, %v2094
    %v2096 = vand.u32 %v2095, 4294901760
    %2097 = vmatmul.f32.gmra.mxu0 %v2096
    %v2098 = vpop.f32.mrf.mxu0
    %v2099 = vadd.f32 %v1987, %v2098
    %v2100 = vand.u32 %v1621, 4294901760
    %v2101 = vsub.f32 %v1621, %v2100
    %v2102 = vand.u32 %v2101, 4294901760
    %2103 = vmatmul.f32.gmra.mxu0 %v2102
    %v2104 = vpop.f32.mrf.mxu0
    %v2105 = vadd.f32 %v1992, %v2104
    %v2106 = vand.u32 %v1624, 4294901760
    %v2107 = vsub.f32 %v1624, %v2106
    %v2108 = vand.u32 %v2107, 4294901760
    %2109 = vmatmul.f32.gmra.mxu0 %v2108
    %v2110 = vpop.f32.mrf.mxu0
    %v2111 = vadd.f32 %v1997, %v2110
    %v2112 = vand.u32 %v1627, 4294901760
    %v2113 = vsub.f32 %v1627, %v2112
    %v2114 = vand.u32 %v2113, 4294901760
    %2115 = vmatmul.f32.gmra.mxu0 %v2114
    %v2116 = vpop.f32.mrf.mxu0
    %v2117 = vadd.f32 %v2002, %v2116
    %v2118 = vand.u32 %v1630, 4294901760
    %v2119 = vsub.f32 %v1630, %v2118
    %v2120 = vand.u32 %v2119, 4294901760
    %2121 = vmatmul.f32.gmra.mxu0 %v2120
    %v2122 = vpop.f32.mrf.mxu0
    %v2123 = vadd.f32 %v2007, %v2122
    %v2124 = vand.u32 %v1633, 4294901760
    %v2125 = vsub.f32 %v1633, %v2124
    %v2126 = vand.u32 %v2125, 4294901760
    %2127 = vmatmul.f32.gmra.mxu0 %v2126
    %v2128 = vpop.f32.mrf.mxu0
    %v2129 = vadd.f32 %v2012, %v2128
    %v2130 = vand.u32 %v1636, 4294901760
    %v2131 = vsub.f32 %v1636, %v2130
    %v2132 = vand.u32 %v2131, 4294901760
    %2133 = vmatmul.f32.gmra.mxu0 %v2132
    %v2134 = vpop.f32.mrf.mxu0
    %v2135 = vadd.f32 %v2017, %v2134
    %v2136 = vand.u32 %v1639, 4294901760
    %v2137 = vsub.f32 %v1639, %v2136
    %v2138 = vand.u32 %v2137, 4294901760
    %2139 = vmatmul.f32.gmra.mxu0 %v2138
    %v2140 = vpop.f32.mrf.mxu0
    %v2141 = vadd.f32 %v2022, %v2140
    %v2142 = vand.u32 %v1642, 4294901760
    %v2143 = vsub.f32 %v1642, %v2142
    %v2144 = vand.u32 %v2143, 4294901760
    %2145 = vmatmul.f32.gmra.mxu0 %v2144
    %v2146 = vpop.f32.mrf.mxu0
    %v2147 = vadd.f32 %v2027, %v2146
    %v2148 = vand.u32 %v1645, 4294901760
    %v2149 = vsub.f32 %v1645, %v2148
    %v2150 = vand.u32 %v2149, 4294901760
    %2151 = vmatmul.f32.gmra.mxu0 %v2150
    %v2152 = vpop.f32.mrf.mxu0
    %v2153 = vadd.f32 %v2032, %v2152
    %2154 = vdwg.mxu0
    %2155 = vmatpush.msra.mxu0 0.0
    %2156 = vmatpush.msra.mxu0 0.0
    %2157 = vmatpush.msra.mxu0 0.0
    %2158 = vmatpush.msra.mxu0 0.0
    %2159 = vmatpush.msra.mxu0 0.0
    %2160 = vmatpush.msra.mxu0 0.0
    %2161 = vmatpush.msra.mxu0 0.0
    %2162 = vmatpush.msra.mxu0 0.0
    %v2163 = vand.u32 %v1597, 4294901760
    %v2164 = vsub.f32 %v1597, %v2163
    %v2165 = vand.u32 %v2164, 4294901760
    %2166 = vmatpush.msra.mxu0 %v2165
    %v2167 = vand.u32 %v1596, 4294901760
    %v2168 = vsub.f32 %v1596, %v2167
    %v2169 = vand.u32 %v2168, 4294901760
    %2170 = vmatpush.msra.mxu0 %v2169
    %v2171 = vand.u32 %v1595, 4294901760
    %v2172 = vsub.f32 %v1595, %v2171
    %v2173 = vand.u32 %v2172, 4294901760
    %2174 = vmatpush.msra.mxu0 %v2173
    %v2175 = vand.u32 %v1594, 4294901760
    %v2176 = vsub.f32 %v1594, %v2175
    %v2177 = vand.u32 %v2176, 4294901760
    %2178 = vmatpush.msra.mxu0 %v2177
    %v2179 = vand.u32 %v1593, 4294901760
    %v2180 = vsub.f32 %v1593, %v2179
    %v2181 = vand.u32 %v2180, 4294901760
    %2182 = vmatpush.msra.mxu0 %v2181
    %v2183 = vand.u32 %v1592, 4294901760
    %v2184 = vsub.f32 %v1592, %v2183
    %v2185 = vand.u32 %v2184, 4294901760
    %2186 = vmatpush.msra.mxu0 %v2185
    %v2187 = vand.u32 %v1591, 4294901760
    %v2188 = vsub.f32 %v1591, %v2187
    %v2189 = vand.u32 %v2188, 4294901760
    %2190 = vmatpush.msra.mxu0 %v2189
    %v2191 = vand.u32 %v1590, 4294901760
    %v2192 = vsub.f32 %v1590, %v2191
    %v2193 = vand.u32 %v2192, 4294901760
    %2194 = vmatpush.msra.mxu0 %v2193
    %v2195 = vand.u32 %v1600, 4294901760
    %2196 = vmatmul.f32.gmra.mxu0 %v2195
    %v2197 = vpop.f32.mrf.mxu0
    %v2198 = vadd.f32 %v2063, %v2197
    %v2199 = vand.u32 %v1603, 4294901760
    %2200 = vmatmul.f32.gmra.mxu0 %v2199
    %v2201 = vpop.f32.mrf.mxu0
    %v2202 = vadd.f32 %v2069, %v2201
    %v2203 = vand.u32 %v1606, 4294901760
    %2204 = vmatmul.f32.gmra.mxu0 %v2203
    %v2205 = vpop.f32.mrf.mxu0
    %v2206 = vadd.f32 %v2075, %v2205
    %v2207 = vand.u32 %v1609, 4294901760
    %2208 = vmatmul.f32.gmra.mxu0 %v2207
    %v2209 = vpop.f32.mrf.mxu0
    %v2210 = vadd.f32 %v2081, %v2209
    %v2211 = vand.u32 %v1612, 4294901760
    %2212 = vmatmul.f32.gmra.mxu0 %v2211
    %v2213 = vpop.f32.mrf.mxu0
    %v2214 = vadd.f32 %v2087, %v2213
    %v2215 = vand.u32 %v1615, 4294901760
    %2216 = vmatmul.f32.gmra.mxu0 %v2215
    %v2217 = vpop.f32.mrf.mxu0
    %v2218 = vadd.f32 %v2093, %v2217
    %v2219 = vand.u32 %v1618, 4294901760
    %2220 = vmatmul.f32.gmra.mxu0 %v2219
    %v2221 = vpop.f32.mrf.mxu0
    %v2222 = vadd.f32 %v2099, %v2221
    %v2223 = vand.u32 %v1621, 4294901760
    %2224 = vmatmul.f32.gmra.mxu0 %v2223
    %v2225 = vpop.f32.mrf.mxu0
    %v2226 = vadd.f32 %v2105, %v2225
    %v2227 = vand.u32 %v1624, 4294901760
    %2228 = vmatmul.f32.gmra.mxu0 %v2227
    %v2229 = vpop.f32.mrf.mxu0
    %v2230 = vadd.f32 %v2111, %v2229
    %v2231 = vand.u32 %v1627, 4294901760
    %2232 = vmatmul.f32.gmra.mxu0 %v2231
    %v2233 = vpop.f32.mrf.mxu0
    %v2234 = vadd.f32 %v2117, %v2233
    %v2235 = vand.u32 %v1630, 4294901760
    %2236 = vmatmul.f32.gmra.mxu0 %v2235
    %v2237 = vpop.f32.mrf.mxu0
    %v2238 = vadd.f32 %v2123, %v2237
    %v2239 = vand.u32 %v1633, 4294901760
    %2240 = vmatmul.f32.gmra.mxu0 %v2239
    %v2241 = vpop.f32.mrf.mxu0
    %v2242 = vadd.f32 %v2129, %v2241
    %v2243 = vand.u32 %v1636, 4294901760
    %2244 = vmatmul.f32.gmra.mxu0 %v2243
    %v2245 = vpop.f32.mrf.mxu0
    %v2246 = vadd.f32 %v2135, %v2245
    %v2247 = vand.u32 %v1639, 4294901760
    %2248 = vmatmul.f32.gmra.mxu0 %v2247
    %v2249 = vpop.f32.mrf.mxu0
    %v2250 = vadd.f32 %v2141, %v2249
    %v2251 = vand.u32 %v1642, 4294901760
    %2252 = vmatmul.f32.gmra.mxu0 %v2251
    %v2253 = vpop.f32.mrf.mxu0
    %v2254 = vadd.f32 %v2147, %v2253
    %v2255 = vand.u32 %v1645, 4294901760
    %2256 = vmatmul.f32.gmra.mxu0 %v2255
    %v2257 = vpop.f32.mrf.mxu0
    %v2258 = vadd.f32 %v2153, %v2257
    %2259 = vdwg.mxu0
    %2260 = vmatpush.msra.mxu0 0.0
    %2261 = vmatpush.msra.mxu0 0.0
    %2262 = vmatpush.msra.mxu0 0.0
    %2263 = vmatpush.msra.mxu0 0.0
    %2264 = vmatpush.msra.mxu0 0.0
    %2265 = vmatpush.msra.mxu0 0.0
    %2266 = vmatpush.msra.mxu0 0.0
    %2267 = vmatpush.msra.mxu0 0.0
    %v2268 = vand.u32 %v1597, 4294901760
    %2269 = vmatpush.msra.mxu0 %v2268
    %v2270 = vand.u32 %v1596, 4294901760
    %2271 = vmatpush.msra.mxu0 %v2270
    %v2272 = vand.u32 %v1595, 4294901760
    %2273 = vmatpush.msra.mxu0 %v2272
    %v2274 = vand.u32 %v1594, 4294901760
    %2275 = vmatpush.msra.mxu0 %v2274
    %v2276 = vand.u32 %v1593, 4294901760
    %2277 = vmatpush.msra.mxu0 %v2276
    %v2278 = vand.u32 %v1592, 4294901760
    %2279 = vmatpush.msra.mxu0 %v2278
    %v2280 = vand.u32 %v1591, 4294901760
    %2281 = vmatpush.msra.mxu0 %v2280
    %v2282 = vand.u32 %v1590, 4294901760
    %2283 = vmatpush.msra.mxu0 %v2282
    %v2284 = vand.u32 %v1600, 4294901760
    %2285 = vmatmul.f32.gmra.mxu0 %v2284
    %v2286 = vpop.f32.mrf.mxu0
    %v2287 = vadd.f32 %v2198, %v2286
    %v2288 = vand.u32 %v1603, 4294901760
    %2289 = vmatmul.f32.gmra.mxu0 %v2288
    %v2290 = vpop.f32.mrf.mxu0
    %v2291 = vadd.f32 %v2202, %v2290
    %v2292 = vand.u32 %v1606, 4294901760
    %2293 = vmatmul.f32.gmra.mxu0 %v2292
    %v2294 = vpop.f32.mrf.mxu0
    %v2295 = vadd.f32 %v2206, %v2294
    %v2296 = vand.u32 %v1609, 4294901760
    %2297 = vmatmul.f32.gmra.mxu0 %v2296
    %v2298 = vpop.f32.mrf.mxu0
    %v2299 = vadd.f32 %v2210, %v2298
    %v2300 = vand.u32 %v1612, 4294901760
    %2301 = vmatmul.f32.gmra.mxu0 %v2300
    %v2302 = vpop.f32.mrf.mxu0
    %v2303 = vadd.f32 %v2214, %v2302
    %v2304 = vand.u32 %v1615, 4294901760
    %2305 = vmatmul.f32.gmra.mxu0 %v2304
    %v2306 = vpop.f32.mrf.mxu0
    %v2307 = vadd.f32 %v2218, %v2306
    %v2308 = vand.u32 %v1618, 4294901760
    %2309 = vmatmul.f32.gmra.mxu0 %v2308
    %v2310 = vpop.f32.mrf.mxu0
    %v2311 = vadd.f32 %v2222, %v2310
    %v2312 = vand.u32 %v1621, 4294901760
    %2313 = vmatmul.f32.gmra.mxu0 %v2312
    %v2314 = vpop.f32.mrf.mxu0
    %v2315 = vadd.f32 %v2226, %v2314
    %v2316 = vand.u32 %v1624, 4294901760
    %2317 = vmatmul.f32.gmra.mxu0 %v2316
    %v2318 = vpop.f32.mrf.mxu0
    %v2319 = vadd.f32 %v2230, %v2318
    %v2320 = vand.u32 %v1627, 4294901760
    %2321 = vmatmul.f32.gmra.mxu0 %v2320
    %v2322 = vpop.f32.mrf.mxu0
    %v2323 = vadd.f32 %v2234, %v2322
    %v2324 = vand.u32 %v1630, 4294901760
    %2325 = vmatmul.f32.gmra.mxu0 %v2324
    %v2326 = vpop.f32.mrf.mxu0
    %v2327 = vadd.f32 %v2238, %v2326
    %v2328 = vand.u32 %v1633, 4294901760
    %2329 = vmatmul.f32.gmra.mxu0 %v2328
    %v2330 = vpop.f32.mrf.mxu0
    %v2331 = vadd.f32 %v2242, %v2330
    %v2332 = vand.u32 %v1636, 4294901760
    %2333 = vmatmul.f32.gmra.mxu0 %v2332
    %v2334 = vpop.f32.mrf.mxu0
    %v2335 = vadd.f32 %v2246, %v2334
    %v2336 = vand.u32 %v1639, 4294901760
    %2337 = vmatmul.f32.gmra.mxu0 %v2336
    %v2338 = vpop.f32.mrf.mxu0
    %v2339 = vadd.f32 %v2250, %v2338
    %v2340 = vand.u32 %v1642, 4294901760
    %2341 = vmatmul.f32.gmra.mxu0 %v2340
    %v2342 = vpop.f32.mrf.mxu0
    %v2343 = vadd.f32 %v2254, %v2342
    %v2344 = vand.u32 %v1645, 4294901760
    %2345 = vmatmul.f32.gmra.mxu0 %v2344
    %v2346 = vpop.f32.mrf.mxu0
    %v2347 = vadd.f32 %v2258, %v2346
    %2348 = vdwg.mxu0
    %v2349 = vand.u32 %v2347, 4294901760
    %2350 = vmatpush.msra.mxu0 %v2349
    %v2351 = vand.u32 %v2343, 4294901760
    %2352 = vmatpush.msra.mxu0 %v2351
    %v2353 = vand.u32 %v2339, 4294901760
    %2354 = vmatpush.msra.mxu0 %v2353
    %v2355 = vand.u32 %v2335, 4294901760
    %2356 = vmatpush.msra.mxu0 %v2355
    %v2357 = vand.u32 %v2331, 4294901760
    %2358 = vmatpush.msra.mxu0 %v2357
    %v2359 = vand.u32 %v2327, 4294901760
    %2360 = vmatpush.msra.mxu0 %v2359
    %v2361 = vand.u32 %v2323, 4294901760
    %2362 = vmatpush.msra.mxu0 %v2361
    %v2363 = vand.u32 %v2319, 4294901760
    %2364 = vmatpush.msra.mxu0 %v2363
    %v2365 = vand.u32 %v2315, 4294901760
    %2366 = vmatpush.msra.mxu0 %v2365
    %v2367 = vand.u32 %v2311, 4294901760
    %2368 = vmatpush.msra.mxu0 %v2367
    %v2369 = vand.u32 %v2307, 4294901760
    %2370 = vmatpush.msra.mxu0 %v2369
    %v2371 = vand.u32 %v2303, 4294901760
    %2372 = vmatpush.msra.mxu0 %v2371
    %v2373 = vand.u32 %v2299, 4294901760
    %2374 = vmatpush.msra.mxu0 %v2373
    %v2375 = vand.u32 %v2295, 4294901760
    %2376 = vmatpush.msra.mxu0 %v2375
    %v2377 = vand.u32 %v2291, 4294901760
    %2378 = vmatpush.msra.mxu0 %v2377
    %v2379 = vand.u32 %v2287, 4294901760
    %2380 = vmatpush.msra.mxu0 %v2379
    %v2381 = vand.u32 %v33, 4294901760
    %v2382 = vsub.f32 %v33, %v2381
    %v2383 = vand.u32 %v2382, 4294901760
    %v2384 = vsub.f32 %v2382, %v2383
    %v2385 = vand.u32 %v2384, 4294901760
    %2386 = vmatmul.f32.gmra.mxu0 %v2385
    %v2387 = vpop.f32.mrf.mxu0
    %v2388 = vadd.f32 0.0, %v2387
    %v2389 = vand.u32 %v34, 4294901760
    %v2390 = vsub.f32 %v34, %v2389
    %v2391 = vand.u32 %v2390, 4294901760
    %v2392 = vsub.f32 %v2390, %v2391
    %v2393 = vand.u32 %v2392, 4294901760
    %2394 = vmatmul.f32.gmra.mxu0 %v2393
    %v2395 = vpop.f32.mrf.mxu0
    %v2396 = vadd.f32 0.0, %v2395
    %v2397 = vand.u32 %v35, 4294901760
    %v2398 = vsub.f32 %v35, %v2397
    %v2399 = vand.u32 %v2398, 4294901760
    %v2400 = vsub.f32 %v2398, %v2399
    %v2401 = vand.u32 %v2400, 4294901760
    %2402 = vmatmul.f32.gmra.mxu0 %v2401
    %v2403 = vpop.f32.mrf.mxu0
    %v2404 = vadd.f32 0.0, %v2403
    %v2405 = vand.u32 %v36, 4294901760
    %v2406 = vsub.f32 %v36, %v2405
    %v2407 = vand.u32 %v2406, 4294901760
    %v2408 = vsub.f32 %v2406, %v2407
    %v2409 = vand.u32 %v2408, 4294901760
    %2410 = vmatmul.f32.gmra.mxu0 %v2409
    %v2411 = vpop.f32.mrf.mxu0
    %v2412 = vadd.f32 0.0, %v2411
    %v2413 = vand.u32 %v37, 4294901760
    %v2414 = vsub.f32 %v37, %v2413
    %v2415 = vand.u32 %v2414, 4294901760
    %v2416 = vsub.f32 %v2414, %v2415
    %v2417 = vand.u32 %v2416, 4294901760
    %2418 = vmatmul.f32.gmra.mxu0 %v2417
    %v2419 = vpop.f32.mrf.mxu0
    %v2420 = vadd.f32 0.0, %v2419
    %v2421 = vand.u32 %v38, 4294901760
    %v2422 = vsub.f32 %v38, %v2421
    %v2423 = vand.u32 %v2422, 4294901760
    %v2424 = vsub.f32 %v2422, %v2423
    %v2425 = vand.u32 %v2424, 4294901760
    %2426 = vmatmul.f32.gmra.mxu0 %v2425
    %v2427 = vpop.f32.mrf.mxu0
    %v2428 = vadd.f32 0.0, %v2427
    %v2429 = vand.u32 %v39, 4294901760
    %v2430 = vsub.f32 %v39, %v2429
    %v2431 = vand.u32 %v2430, 4294901760
    %v2432 = vsub.f32 %v2430, %v2431
    %v2433 = vand.u32 %v2432, 4294901760
    %2434 = vmatmul.f32.gmra.mxu0 %v2433
    %v2435 = vpop.f32.mrf.mxu0
    %v2436 = vadd.f32 0.0, %v2435
    %v2437 = vand.u32 %v40, 4294901760
    %v2438 = vsub.f32 %v40, %v2437
    %v2439 = vand.u32 %v2438, 4294901760
    %v2440 = vsub.f32 %v2438, %v2439
    %v2441 = vand.u32 %v2440, 4294901760
    %2442 = vmatmul.f32.gmra.mxu0 %v2441
    %v2443 = vpop.f32.mrf.mxu0
    %v2444 = vadd.f32 0.0, %v2443
    %v2445 = vand.u32 %v41, 4294901760
    %v2446 = vsub.f32 %v41, %v2445
    %v2447 = vand.u32 %v2446, 4294901760
    %v2448 = vsub.f32 %v2446, %v2447
    %v2449 = vand.u32 %v2448, 4294901760
    %2450 = vmatmul.f32.gmra.mxu0 %v2449
    %v2451 = vpop.f32.mrf.mxu0
    %v2452 = vadd.f32 0.0, %v2451
    %v2453 = vand.u32 %v42, 4294901760
    %v2454 = vsub.f32 %v42, %v2453
    %v2455 = vand.u32 %v2454, 4294901760
    %v2456 = vsub.f32 %v2454, %v2455
    %v2457 = vand.u32 %v2456, 4294901760
    %2458 = vmatmul.f32.gmra.mxu0 %v2457
    %v2459 = vpop.f32.mrf.mxu0
    %v2460 = vadd.f32 0.0, %v2459
    %v2461 = vand.u32 %v43, 4294901760
    %v2462 = vsub.f32 %v43, %v2461
    %v2463 = vand.u32 %v2462, 4294901760
    %v2464 = vsub.f32 %v2462, %v2463
    %v2465 = vand.u32 %v2464, 4294901760
    %2466 = vmatmul.f32.gmra.mxu0 %v2465
    %v2467 = vpop.f32.mrf.mxu0
    %v2468 = vadd.f32 0.0, %v2467
    %v2469 = vand.u32 %v44, 4294901760
    %v2470 = vsub.f32 %v44, %v2469
    %v2471 = vand.u32 %v2470, 4294901760
    %v2472 = vsub.f32 %v2470, %v2471
    %v2473 = vand.u32 %v2472, 4294901760
    %2474 = vmatmul.f32.gmra.mxu0 %v2473
    %v2475 = vpop.f32.mrf.mxu0
    %v2476 = vadd.f32 0.0, %v2475
    %v2477 = vand.u32 %v45, 4294901760
    %v2478 = vsub.f32 %v45, %v2477
    %v2479 = vand.u32 %v2478, 4294901760
    %v2480 = vsub.f32 %v2478, %v2479
    %v2481 = vand.u32 %v2480, 4294901760
    %2482 = vmatmul.f32.gmra.mxu0 %v2481
    %v2483 = vpop.f32.mrf.mxu0
    %v2484 = vadd.f32 0.0, %v2483
    %v2485 = vand.u32 %v46, 4294901760
    %v2486 = vsub.f32 %v46, %v2485
    %v2487 = vand.u32 %v2486, 4294901760
    %v2488 = vsub.f32 %v2486, %v2487
    %v2489 = vand.u32 %v2488, 4294901760
    %2490 = vmatmul.f32.gmra.mxu0 %v2489
    %v2491 = vpop.f32.mrf.mxu0
    %v2492 = vadd.f32 0.0, %v2491
    %v2493 = vand.u32 %v47, 4294901760
    %v2494 = vsub.f32 %v47, %v2493
    %v2495 = vand.u32 %v2494, 4294901760
    %v2496 = vsub.f32 %v2494, %v2495
    %v2497 = vand.u32 %v2496, 4294901760
    %2498 = vmatmul.f32.gmra.mxu0 %v2497
    %v2499 = vpop.f32.mrf.mxu0
    %v2500 = vadd.f32 0.0, %v2499
    %v2501 = vand.u32 %v48, 4294901760
    %v2502 = vsub.f32 %v48, %v2501
    %v2503 = vand.u32 %v2502, 4294901760
    %v2504 = vsub.f32 %v2502, %v2503
    %v2505 = vand.u32 %v2504, 4294901760
    %2506 = vmatmul.f32.gmra.mxu0 %v2505
    %v2507 = vpop.f32.mrf.mxu0
    %v2508 = vadd.f32 0.0, %v2507
    %2509 = vdwg.mxu0
    %v2510 = vand.u32 %v2347, 4294901760
    %v2511 = vsub.f32 %v2347, %v2510
    %v2512 = vand.u32 %v2511, 4294901760
    %v2513 = vsub.f32 %v2511, %v2512
    %v2514 = vand.u32 %v2513, 4294901760
    %2515 = vmatpush.msra.mxu0 %v2514
    %v2516 = vand.u32 %v2343, 4294901760
    %v2517 = vsub.f32 %v2343, %v2516
    %v2518 = vand.u32 %v2517, 4294901760
    %v2519 = vsub.f32 %v2517, %v2518
    %v2520 = vand.u32 %v2519, 4294901760
    %2521 = vmatpush.msra.mxu0 %v2520
    %v2522 = vand.u32 %v2339, 4294901760
    %v2523 = vsub.f32 %v2339, %v2522
    %v2524 = vand.u32 %v2523, 4294901760
    %v2525 = vsub.f32 %v2523, %v2524
    %v2526 = vand.u32 %v2525, 4294901760
    %2527 = vmatpush.msra.mxu0 %v2526
    %v2528 = vand.u32 %v2335, 4294901760
    %v2529 = vsub.f32 %v2335, %v2528
    %v2530 = vand.u32 %v2529, 4294901760
    %v2531 = vsub.f32 %v2529, %v2530
    %v2532 = vand.u32 %v2531, 4294901760
    %2533 = vmatpush.msra.mxu0 %v2532
    %v2534 = vand.u32 %v2331, 4294901760
    %v2535 = vsub.f32 %v2331, %v2534
    %v2536 = vand.u32 %v2535, 4294901760
    %v2537 = vsub.f32 %v2535, %v2536
    %v2538 = vand.u32 %v2537, 4294901760
    %2539 = vmatpush.msra.mxu0 %v2538
    %v2540 = vand.u32 %v2327, 4294901760
    %v2541 = vsub.f32 %v2327, %v2540
    %v2542 = vand.u32 %v2541, 4294901760
    %v2543 = vsub.f32 %v2541, %v2542
    %v2544 = vand.u32 %v2543, 4294901760
    %2545 = vmatpush.msra.mxu0 %v2544
    %v2546 = vand.u32 %v2323, 4294901760
    %v2547 = vsub.f32 %v2323, %v2546
    %v2548 = vand.u32 %v2547, 4294901760
    %v2549 = vsub.f32 %v2547, %v2548
    %v2550 = vand.u32 %v2549, 4294901760
    %2551 = vmatpush.msra.mxu0 %v2550
    %v2552 = vand.u32 %v2319, 4294901760
    %v2553 = vsub.f32 %v2319, %v2552
    %v2554 = vand.u32 %v2553, 4294901760
    %v2555 = vsub.f32 %v2553, %v2554
    %v2556 = vand.u32 %v2555, 4294901760
    %2557 = vmatpush.msra.mxu0 %v2556
    %v2558 = vand.u32 %v2315, 4294901760
    %v2559 = vsub.f32 %v2315, %v2558
    %v2560 = vand.u32 %v2559, 4294901760
    %v2561 = vsub.f32 %v2559, %v2560
    %v2562 = vand.u32 %v2561, 4294901760
    %2563 = vmatpush.msra.mxu0 %v2562
    %v2564 = vand.u32 %v2311, 4294901760
    %v2565 = vsub.f32 %v2311, %v2564
    %v2566 = vand.u32 %v2565, 4294901760
    %v2567 = vsub.f32 %v2565, %v2566
    %v2568 = vand.u32 %v2567, 4294901760
    %2569 = vmatpush.msra.mxu0 %v2568
    %v2570 = vand.u32 %v2307, 4294901760
    %v2571 = vsub.f32 %v2307, %v2570
    %v2572 = vand.u32 %v2571, 4294901760
    %v2573 = vsub.f32 %v2571, %v2572
    %v2574 = vand.u32 %v2573, 4294901760
    %2575 = vmatpush.msra.mxu0 %v2574
    %v2576 = vand.u32 %v2303, 4294901760
    %v2577 = vsub.f32 %v2303, %v2576
    %v2578 = vand.u32 %v2577, 4294901760
    %v2579 = vsub.f32 %v2577, %v2578
    %v2580 = vand.u32 %v2579, 4294901760
    %2581 = vmatpush.msra.mxu0 %v2580
    %v2582 = vand.u32 %v2299, 4294901760
    %v2583 = vsub.f32 %v2299, %v2582
    %v2584 = vand.u32 %v2583, 4294901760
    %v2585 = vsub.f32 %v2583, %v2584
    %v2586 = vand.u32 %v2585, 4294901760
    %2587 = vmatpush.msra.mxu0 %v2586
    %v2588 = vand.u32 %v2295, 4294901760
    %v2589 = vsub.f32 %v2295, %v2588
    %v2590 = vand.u32 %v2589, 4294901760
    %v2591 = vsub.f32 %v2589, %v2590
    %v2592 = vand.u32 %v2591, 4294901760
    %2593 = vmatpush.msra.mxu0 %v2592
    %v2594 = vand.u32 %v2291, 4294901760
    %v2595 = vsub.f32 %v2291, %v2594
    %v2596 = vand.u32 %v2595, 4294901760
    %v2597 = vsub.f32 %v2595, %v2596
    %v2598 = vand.u32 %v2597, 4294901760
    %2599 = vmatpush.msra.mxu0 %v2598
    %v2600 = vand.u32 %v2287, 4294901760
    %v2601 = vsub.f32 %v2287, %v2600
    %v2602 = vand.u32 %v2601, 4294901760
    %v2603 = vsub.f32 %v2601, %v2602
    %v2604 = vand.u32 %v2603, 4294901760
    %2605 = vmatpush.msra.mxu0 %v2604
    %v2606 = vand.u32 %v33, 4294901760
    %2607 = vmatmul.f32.gmra.mxu0 %v2606
    %v2608 = vpop.f32.mrf.mxu0
    %v2609 = vadd.f32 %v2388, %v2608
    %v2610 = vand.u32 %v34, 4294901760
    %2611 = vmatmul.f32.gmra.mxu0 %v2610
    %v2612 = vpop.f32.mrf.mxu0
    %v2613 = vadd.f32 %v2396, %v2612
    %v2614 = vand.u32 %v35, 4294901760
    %2615 = vmatmul.f32.gmra.mxu0 %v2614
    %v2616 = vpop.f32.mrf.mxu0
    %v2617 = vadd.f32 %v2404, %v2616
    %v2618 = vand.u32 %v36, 4294901760
    %2619 = vmatmul.f32.gmra.mxu0 %v2618
    %v2620 = vpop.f32.mrf.mxu0
    %v2621 = vadd.f32 %v2412, %v2620
    %v2622 = vand.u32 %v37, 4294901760
    %2623 = vmatmul.f32.gmra.mxu0 %v2622
    %v2624 = vpop.f32.mrf.mxu0
    %v2625 = vadd.f32 %v2420, %v2624
    %v2626 = vand.u32 %v38, 4294901760
    %2627 = vmatmul.f32.gmra.mxu0 %v2626
    %v2628 = vpop.f32.mrf.mxu0
    %v2629 = vadd.f32 %v2428, %v2628
    %v2630 = vand.u32 %v39, 4294901760
    %2631 = vmatmul.f32.gmra.mxu0 %v2630
    %v2632 = vpop.f32.mrf.mxu0
    %v2633 = vadd.f32 %v2436, %v2632
    %v2634 = vand.u32 %v40, 4294901760
    %2635 = vmatmul.f32.gmra.mxu0 %v2634
    %v2636 = vpop.f32.mrf.mxu0
    %v2637 = vadd.f32 %v2444, %v2636
    %v2638 = vand.u32 %v41, 4294901760
    %2639 = vmatmul.f32.gmra.mxu0 %v2638
    %v2640 = vpop.f32.mrf.mxu0
    %v2641 = vadd.f32 %v2452, %v2640
    %v2642 = vand.u32 %v42, 4294901760
    %2643 = vmatmul.f32.gmra.mxu0 %v2642
    %v2644 = vpop.f32.mrf.mxu0
    %v2645 = vadd.f32 %v2460, %v2644
    %v2646 = vand.u32 %v43, 4294901760
    %2647 = vmatmul.f32.gmra.mxu0 %v2646
    %v2648 = vpop.f32.mrf.mxu0
    %v2649 = vadd.f32 %v2468, %v2648
    %v2650 = vand.u32 %v44, 4294901760
    %2651 = vmatmul.f32.gmra.mxu0 %v2650
    %v2652 = vpop.f32.mrf.mxu0
    %v2653 = vadd.f32 %v2476, %v2652
    %v2654 = vand.u32 %v45, 4294901760
    %2655 = vmatmul.f32.gmra.mxu0 %v2654
    %v2656 = vpop.f32.mrf.mxu0
    %v2657 = vadd.f32 %v2484, %v2656
    %v2658 = vand.u32 %v46, 4294901760
    %2659 = vmatmul.f32.gmra.mxu0 %v2658
    %v2660 = vpop.f32.mrf.mxu0
    %v2661 = vadd.f32 %v2492, %v2660
    %v2662 = vand.u32 %v47, 4294901760
    %2663 = vmatmul.f32.gmra.mxu0 %v2662
    %v2664 = vpop.f32.mrf.mxu0
    %v2665 = vadd.f32 %v2500, %v2664
    %v2666 = vand.u32 %v48, 4294901760
    %2667 = vmatmul.f32.gmra.mxu0 %v2666
    %v2668 = vpop.f32.mrf.mxu0
    %v2669 = vadd.f32 %v2508, %v2668
    %2670 = vdwg.mxu0
    %v2671 = vand.u32 %v2347, 4294901760
    %v2672 = vsub.f32 %v2347, %v2671
    %2673 = vmatpush.msra.mxu0 %v2672
    %v2674 = vand.u32 %v2343, 4294901760
    %v2675 = vsub.f32 %v2343, %v2674
    %2676 = vmatpush.msra.mxu0 %v2675
    %v2677 = vand.u32 %v2339, 4294901760
    %v2678 = vsub.f32 %v2339, %v2677
    %2679 = vmatpush.msra.mxu0 %v2678
    %v2680 = vand.u32 %v2335, 4294901760
    %v2681 = vsub.f32 %v2335, %v2680
    %2682 = vmatpush.msra.mxu0 %v2681
    %v2683 = vand.u32 %v2331, 4294901760
    %v2684 = vsub.f32 %v2331, %v2683
    %2685 = vmatpush.msra.mxu0 %v2684
    %v2686 = vand.u32 %v2327, 4294901760
    %v2687 = vsub.f32 %v2327, %v2686
    %2688 = vmatpush.msra.mxu0 %v2687
    %v2689 = vand.u32 %v2323, 4294901760
    %v2690 = vsub.f32 %v2323, %v2689
    %2691 = vmatpush.msra.mxu0 %v2690
    %v2692 = vand.u32 %v2319, 4294901760
    %v2693 = vsub.f32 %v2319, %v2692
    %2694 = vmatpush.msra.mxu0 %v2693
    %v2695 = vand.u32 %v2315, 4294901760
    %v2696 = vsub.f32 %v2315, %v2695
    %2697 = vmatpush.msra.mxu0 %v2696
    %v2698 = vand.u32 %v2311, 4294901760
    %v2699 = vsub.f32 %v2311, %v2698
    %2700 = vmatpush.msra.mxu0 %v2699
    %v2701 = vand.u32 %v2307, 4294901760
    %v2702 = vsub.f32 %v2307, %v2701
    %2703 = vmatpush.msra.mxu0 %v2702
    %v2704 = vand.u32 %v2303, 4294901760
    %v2705 = vsub.f32 %v2303, %v2704
    %2706 = vmatpush.msra.mxu0 %v2705
    %v2707 = vand.u32 %v2299, 4294901760
    %v2708 = vsub.f32 %v2299, %v2707
    %2709 = vmatpush.msra.mxu0 %v2708
    %v2710 = vand.u32 %v2295, 4294901760
    %v2711 = vsub.f32 %v2295, %v2710
    %2712 = vmatpush.msra.mxu0 %v2711
    %v2713 = vand.u32 %v2291, 4294901760
    %v2714 = vsub.f32 %v2291, %v2713
    %2715 = vmatpush.msra.mxu0 %v2714
    %v2716 = vand.u32 %v2287, 4294901760
    %v2717 = vsub.f32 %v2287, %v2716
    %2718 = vmatpush.msra.mxu0 %v2717
    %v2719 = vand.u32 %v33, 4294901760
    %v2720 = vsub.f32 %v33, %v2719
    %2721 = vmatmul.f32.gmra.mxu0 %v2720
    %v2722 = vpop.f32.mrf.mxu0
    %v2723 = vadd.f32 %v2609, %v2722
    %v2724 = vand.u32 %v34, 4294901760
    %v2725 = vsub.f32 %v34, %v2724
    %2726 = vmatmul.f32.gmra.mxu0 %v2725
    %v2727 = vpop.f32.mrf.mxu0
    %v2728 = vadd.f32 %v2613, %v2727
    %v2729 = vand.u32 %v35, 4294901760
    %v2730 = vsub.f32 %v35, %v2729
    %2731 = vmatmul.f32.gmra.mxu0 %v2730
    %v2732 = vpop.f32.mrf.mxu0
    %v2733 = vadd.f32 %v2617, %v2732
    %v2734 = vand.u32 %v36, 4294901760
    %v2735 = vsub.f32 %v36, %v2734
    %2736 = vmatmul.f32.gmra.mxu0 %v2735
    %v2737 = vpop.f32.mrf.mxu0
    %v2738 = vadd.f32 %v2621, %v2737
    %v2739 = vand.u32 %v37, 4294901760
    %v2740 = vsub.f32 %v37, %v2739
    %2741 = vmatmul.f32.gmra.mxu0 %v2740
    %v2742 = vpop.f32.mrf.mxu0
    %v2743 = vadd.f32 %v2625, %v2742
    %v2744 = vand.u32 %v38, 4294901760
    %v2745 = vsub.f32 %v38, %v2744
    %2746 = vmatmul.f32.gmra.mxu0 %v2745
    %v2747 = vpop.f32.mrf.mxu0
    %v2748 = vadd.f32 %v2629, %v2747
    %v2749 = vand.u32 %v39, 4294901760
    %v2750 = vsub.f32 %v39, %v2749
    %2751 = vmatmul.f32.gmra.mxu0 %v2750
    %v2752 = vpop.f32.mrf.mxu0
    %v2753 = vadd.f32 %v2633, %v2752
    %v2754 = vand.u32 %v40, 4294901760
    %v2755 = vsub.f32 %v40, %v2754
    %2756 = vmatmul.f32.gmra.mxu0 %v2755
    %v2757 = vpop.f32.mrf.mxu0
    %v2758 = vadd.f32 %v2637, %v2757
    %v2759 = vand.u32 %v41, 4294901760
    %v2760 = vsub.f32 %v41, %v2759
    %2761 = vmatmul.f32.gmra.mxu0 %v2760
    %v2762 = vpop.f32.mrf.mxu0
    %v2763 = vadd.f32 %v2641, %v2762
    %v2764 = vand.u32 %v42, 4294901760
    %v2765 = vsub.f32 %v42, %v2764
    %2766 = vmatmul.f32.gmra.mxu0 %v2765
    %v2767 = vpop.f32.mrf.mxu0
    %v2768 = vadd.f32 %v2645, %v2767
    %v2769 = vand.u32 %v43, 4294901760
    %v2770 = vsub.f32 %v43, %v2769
    %2771 = vmatmul.f32.gmra.mxu0 %v2770
    %v2772 = vpop.f32.mrf.mxu0
    %v2773 = vadd.f32 %v2649, %v2772
    %v2774 = vand.u32 %v44, 4294901760
    %v2775 = vsub.f32 %v44, %v2774
    %2776 = vmatmul.f32.gmra.mxu0 %v2775
    %v2777 = vpop.f32.mrf.mxu0
    %v2778 = vadd.f32 %v2653, %v2777
    %v2779 = vand.u32 %v45, 4294901760
    %v2780 = vsub.f32 %v45, %v2779
    %2781 = vmatmul.f32.gmra.mxu0 %v2780
    %v2782 = vpop.f32.mrf.mxu0
    %v2783 = vadd.f32 %v2657, %v2782
    %v2784 = vand.u32 %v46, 4294901760
    %v2785 = vsub.f32 %v46, %v2784
    %2786 = vmatmul.f32.gmra.mxu0 %v2785
    %v2787 = vpop.f32.mrf.mxu0
    %v2788 = vadd.f32 %v2661, %v2787
    %v2789 = vand.u32 %v47, 4294901760
    %v2790 = vsub.f32 %v47, %v2789
    %2791 = vmatmul.f32.gmra.mxu0 %v2790
    %v2792 = vpop.f32.mrf.mxu0
    %v2793 = vadd.f32 %v2665, %v2792
    %v2794 = vand.u32 %v48, 4294901760
    %v2795 = vsub.f32 %v48, %v2794
    %2796 = vmatmul.f32.gmra.mxu0 %v2795
    %v2797 = vpop.f32.mrf.mxu0
    %v2798 = vadd.f32 %v2669, %v2797
    %2799 = vdwg.mxu0
    %v2800 = vand.u32 %v2347, 4294901760
    %2801 = vmatpush.msra.mxu0 %v2800
    %v2802 = vand.u32 %v2343, 4294901760
    %2803 = vmatpush.msra.mxu0 %v2802
    %v2804 = vand.u32 %v2339, 4294901760
    %2805 = vmatpush.msra.mxu0 %v2804
    %v2806 = vand.u32 %v2335, 4294901760
    %2807 = vmatpush.msra.mxu0 %v2806
    %v2808 = vand.u32 %v2331, 4294901760
    %2809 = vmatpush.msra.mxu0 %v2808
    %v2810 = vand.u32 %v2327, 4294901760
    %2811 = vmatpush.msra.mxu0 %v2810
    %v2812 = vand.u32 %v2323, 4294901760
    %2813 = vmatpush.msra.mxu0 %v2812
    %v2814 = vand.u32 %v2319, 4294901760
    %2815 = vmatpush.msra.mxu0 %v2814
    %v2816 = vand.u32 %v2315, 4294901760
    %2817 = vmatpush.msra.mxu0 %v2816
    %v2818 = vand.u32 %v2311, 4294901760
    %2819 = vmatpush.msra.mxu0 %v2818
    %v2820 = vand.u32 %v2307, 4294901760
    %2821 = vmatpush.msra.mxu0 %v2820
    %v2822 = vand.u32 %v2303, 4294901760
    %2823 = vmatpush.msra.mxu0 %v2822
    %v2824 = vand.u32 %v2299, 4294901760
    %2825 = vmatpush.msra.mxu0 %v2824
    %v2826 = vand.u32 %v2295, 4294901760
    %2827 = vmatpush.msra.mxu0 %v2826
    %v2828 = vand.u32 %v2291, 4294901760
    %2829 = vmatpush.msra.mxu0 %v2828
    %v2830 = vand.u32 %v2287, 4294901760
    %2831 = vmatpush.msra.mxu0 %v2830
    %v2832 = vand.u32 %v33, 4294901760
    %v2833 = vsub.f32 %v33, %v2832
    %v2834 = vand.u32 %v2833, 4294901760
    %2835 = vmatmul.f32.gmra.mxu0 %v2834
    %v2836 = vpop.f32.mrf.mxu0
    %v2837 = vadd.f32 %v2723, %v2836
    %v2838 = vand.u32 %v34, 4294901760
    %v2839 = vsub.f32 %v34, %v2838
    %v2840 = vand.u32 %v2839, 4294901760
    %2841 = vmatmul.f32.gmra.mxu0 %v2840
    %v2842 = vpop.f32.mrf.mxu0
    %v2843 = vadd.f32 %v2728, %v2842
    %v2844 = vand.u32 %v35, 4294901760
    %v2845 = vsub.f32 %v35, %v2844
    %v2846 = vand.u32 %v2845, 4294901760
    %2847 = vmatmul.f32.gmra.mxu0 %v2846
    %v2848 = vpop.f32.mrf.mxu0
    %v2849 = vadd.f32 %v2733, %v2848
    %v2850 = vand.u32 %v36, 4294901760
    %v2851 = vsub.f32 %v36, %v2850
    %v2852 = vand.u32 %v2851, 4294901760
    %2853 = vmatmul.f32.gmra.mxu0 %v2852
    %v2854 = vpop.f32.mrf.mxu0
    %v2855 = vadd.f32 %v2738, %v2854
    %v2856 = vand.u32 %v37, 4294901760
    %v2857 = vsub.f32 %v37, %v2856
    %v2858 = vand.u32 %v2857, 4294901760
    %2859 = vmatmul.f32.gmra.mxu0 %v2858
    %v2860 = vpop.f32.mrf.mxu0
    %v2861 = vadd.f32 %v2743, %v2860
    %v2862 = vand.u32 %v38, 4294901760
    %v2863 = vsub.f32 %v38, %v2862
    %v2864 = vand.u32 %v2863, 4294901760
    %2865 = vmatmul.f32.gmra.mxu0 %v2864
    %v2866 = vpop.f32.mrf.mxu0
    %v2867 = vadd.f32 %v2748, %v2866
    %v2868 = vand.u32 %v39, 4294901760
    %v2869 = vsub.f32 %v39, %v2868
    %v2870 = vand.u32 %v2869, 4294901760
    %2871 = vmatmul.f32.gmra.mxu0 %v2870
    %v2872 = vpop.f32.mrf.mxu0
    %v2873 = vadd.f32 %v2753, %v2872
    %v2874 = vand.u32 %v40, 4294901760
    %v2875 = vsub.f32 %v40, %v2874
    %v2876 = vand.u32 %v2875, 4294901760
    %2877 = vmatmul.f32.gmra.mxu0 %v2876
    %v2878 = vpop.f32.mrf.mxu0
    %v2879 = vadd.f32 %v2758, %v2878
    %v2880 = vand.u32 %v41, 4294901760
    %v2881 = vsub.f32 %v41, %v2880
    %v2882 = vand.u32 %v2881, 4294901760
    %2883 = vmatmul.f32.gmra.mxu0 %v2882
    %v2884 = vpop.f32.mrf.mxu0
    %v2885 = vadd.f32 %v2763, %v2884
    %v2886 = vand.u32 %v42, 4294901760
    %v2887 = vsub.f32 %v42, %v2886
    %v2888 = vand.u32 %v2887, 4294901760
    %2889 = vmatmul.f32.gmra.mxu0 %v2888
    %v2890 = vpop.f32.mrf.mxu0
    %v2891 = vadd.f32 %v2768, %v2890
    %v2892 = vand.u32 %v43, 4294901760
    %v2893 = vsub.f32 %v43, %v2892
    %v2894 = vand.u32 %v2893, 4294901760
    %2895 = vmatmul.f32.gmra.mxu0 %v2894
    %v2896 = vpop.f32.mrf.mxu0
    %v2897 = vadd.f32 %v2773, %v2896
    %v2898 = vand.u32 %v44, 4294901760
    %v2899 = vsub.f32 %v44, %v2898
    %v2900 = vand.u32 %v2899, 4294901760
    %2901 = vmatmul.f32.gmra.mxu0 %v2900
    %v2902 = vpop.f32.mrf.mxu0
    %v2903 = vadd.f32 %v2778, %v2902
    %v2904 = vand.u32 %v45, 4294901760
    %v2905 = vsub.f32 %v45, %v2904
    %v2906 = vand.u32 %v2905, 4294901760
    %2907 = vmatmul.f32.gmra.mxu0 %v2906
    %v2908 = vpop.f32.mrf.mxu0
    %v2909 = vadd.f32 %v2783, %v2908
    %v2910 = vand.u32 %v46, 4294901760
    %v2911 = vsub.f32 %v46, %v2910
    %v2912 = vand.u32 %v2911, 4294901760
    %2913 = vmatmul.f32.gmra.mxu0 %v2912
    %v2914 = vpop.f32.mrf.mxu0
    %v2915 = vadd.f32 %v2788, %v2914
    %v2916 = vand.u32 %v47, 4294901760
    %v2917 = vsub.f32 %v47, %v2916
    %v2918 = vand.u32 %v2917, 4294901760
    %2919 = vmatmul.f32.gmra.mxu0 %v2918
    %v2920 = vpop.f32.mrf.mxu0
    %v2921 = vadd.f32 %v2793, %v2920
    %v2922 = vand.u32 %v48, 4294901760
    %v2923 = vsub.f32 %v48, %v2922
    %v2924 = vand.u32 %v2923, 4294901760
    %2925 = vmatmul.f32.gmra.mxu0 %v2924
    %v2926 = vpop.f32.mrf.mxu0
    %v2927 = vadd.f32 %v2798, %v2926
    %2928 = vdwg.mxu0
    %v2929 = vand.u32 %v2347, 4294901760
    %v2930 = vsub.f32 %v2347, %v2929
    %v2931 = vand.u32 %v2930, 4294901760
    %2932 = vmatpush.msra.mxu0 %v2931
    %v2933 = vand.u32 %v2343, 4294901760
    %v2934 = vsub.f32 %v2343, %v2933
    %v2935 = vand.u32 %v2934, 4294901760
    %2936 = vmatpush.msra.mxu0 %v2935
    %v2937 = vand.u32 %v2339, 4294901760
    %v2938 = vsub.f32 %v2339, %v2937
    %v2939 = vand.u32 %v2938, 4294901760
    %2940 = vmatpush.msra.mxu0 %v2939
    %v2941 = vand.u32 %v2335, 4294901760
    %v2942 = vsub.f32 %v2335, %v2941
    %v2943 = vand.u32 %v2942, 4294901760
    %2944 = vmatpush.msra.mxu0 %v2943
    %v2945 = vand.u32 %v2331, 4294901760
    %v2946 = vsub.f32 %v2331, %v2945
    %v2947 = vand.u32 %v2946, 4294901760
    %2948 = vmatpush.msra.mxu0 %v2947
    %v2949 = vand.u32 %v2327, 4294901760
    %v2950 = vsub.f32 %v2327, %v2949
    %v2951 = vand.u32 %v2950, 4294901760
    %2952 = vmatpush.msra.mxu0 %v2951
    %v2953 = vand.u32 %v2323, 4294901760
    %v2954 = vsub.f32 %v2323, %v2953
    %v2955 = vand.u32 %v2954, 4294901760
    %2956 = vmatpush.msra.mxu0 %v2955
    %v2957 = vand.u32 %v2319, 4294901760
    %v2958 = vsub.f32 %v2319, %v2957
    %v2959 = vand.u32 %v2958, 4294901760
    %2960 = vmatpush.msra.mxu0 %v2959
    %v2961 = vand.u32 %v2315, 4294901760
    %v2962 = vsub.f32 %v2315, %v2961
    %v2963 = vand.u32 %v2962, 4294901760
    %2964 = vmatpush.msra.mxu0 %v2963
    %v2965 = vand.u32 %v2311, 4294901760
    %v2966 = vsub.f32 %v2311, %v2965
    %v2967 = vand.u32 %v2966, 4294901760
    %2968 = vmatpush.msra.mxu0 %v2967
    %v2969 = vand.u32 %v2307, 4294901760
    %v2970 = vsub.f32 %v2307, %v2969
    %v2971 = vand.u32 %v2970, 4294901760
    %2972 = vmatpush.msra.mxu0 %v2971
    %v2973 = vand.u32 %v2303, 4294901760
    %v2974 = vsub.f32 %v2303, %v2973
    %v2975 = vand.u32 %v2974, 4294901760
    %2976 = vmatpush.msra.mxu0 %v2975
    %v2977 = vand.u32 %v2299, 4294901760
    %v2978 = vsub.f32 %v2299, %v2977
    %v2979 = vand.u32 %v2978, 4294901760
    %2980 = vmatpush.msra.mxu0 %v2979
    %v2981 = vand.u32 %v2295, 4294901760
    %v2982 = vsub.f32 %v2295, %v2981
    %v2983 = vand.u32 %v2982, 4294901760
    %2984 = vmatpush.msra.mxu0 %v2983
    %v2985 = vand.u32 %v2291, 4294901760
    %v2986 = vsub.f32 %v2291, %v2985
    %v2987 = vand.u32 %v2986, 4294901760
    %2988 = vmatpush.msra.mxu0 %v2987
    %v2989 = vand.u32 %v2287, 4294901760
    %v2990 = vsub.f32 %v2287, %v2989
    %v2991 = vand.u32 %v2990, 4294901760
    %2992 = vmatpush.msra.mxu0 %v2991
    %v2993 = vand.u32 %v33, 4294901760
    %2994 = vmatmul.f32.gmra.mxu0 %v2993
    %v2995 = vpop.f32.mrf.mxu0
    %v2996 = vadd.f32 %v2837, %v2995
    %v2997 = vand.u32 %v34, 4294901760
    %2998 = vmatmul.f32.gmra.mxu0 %v2997
    %v2999 = vpop.f32.mrf.mxu0
    %v3000 = vadd.f32 %v2843, %v2999
    %v3001 = vand.u32 %v35, 4294901760
    %3002 = vmatmul.f32.gmra.mxu0 %v3001
    %v3003 = vpop.f32.mrf.mxu0
    %v3004 = vadd.f32 %v2849, %v3003
    %v3005 = vand.u32 %v36, 4294901760
    %3006 = vmatmul.f32.gmra.mxu0 %v3005
    %v3007 = vpop.f32.mrf.mxu0
    %v3008 = vadd.f32 %v2855, %v3007
    %v3009 = vand.u32 %v37, 4294901760
    %3010 = vmatmul.f32.gmra.mxu0 %v3009
    %v3011 = vpop.f32.mrf.mxu0
    %v3012 = vadd.f32 %v2861, %v3011
    %v3013 = vand.u32 %v38, 4294901760
    %3014 = vmatmul.f32.gmra.mxu0 %v3013
    %v3015 = vpop.f32.mrf.mxu0
    %v3016 = vadd.f32 %v2867, %v3015
    %v3017 = vand.u32 %v39, 4294901760
    %3018 = vmatmul.f32.gmra.mxu0 %v3017
    %v3019 = vpop.f32.mrf.mxu0
    %v3020 = vadd.f32 %v2873, %v3019
    %v3021 = vand.u32 %v40, 4294901760
    %3022 = vmatmul.f32.gmra.mxu0 %v3021
    %v3023 = vpop.f32.mrf.mxu0
    %v3024 = vadd.f32 %v2879, %v3023
    %v3025 = vand.u32 %v41, 4294901760
    %3026 = vmatmul.f32.gmra.mxu0 %v3025
    %v3027 = vpop.f32.mrf.mxu0
    %v3028 = vadd.f32 %v2885, %v3027
    %v3029 = vand.u32 %v42, 4294901760
    %3030 = vmatmul.f32.gmra.mxu0 %v3029
    %v3031 = vpop.f32.mrf.mxu0
    %v3032 = vadd.f32 %v2891, %v3031
    %v3033 = vand.u32 %v43, 4294901760
    %3034 = vmatmul.f32.gmra.mxu0 %v3033
    %v3035 = vpop.f32.mrf.mxu0
    %v3036 = vadd.f32 %v2897, %v3035
    %v3037 = vand.u32 %v44, 4294901760
    %3038 = vmatmul.f32.gmra.mxu0 %v3037
    %v3039 = vpop.f32.mrf.mxu0
    %v3040 = vadd.f32 %v2903, %v3039
    %v3041 = vand.u32 %v45, 4294901760
    %3042 = vmatmul.f32.gmra.mxu0 %v3041
    %v3043 = vpop.f32.mrf.mxu0
    %v3044 = vadd.f32 %v2909, %v3043
    %v3045 = vand.u32 %v46, 4294901760
    %3046 = vmatmul.f32.gmra.mxu0 %v3045
    %v3047 = vpop.f32.mrf.mxu0
    %v3048 = vadd.f32 %v2915, %v3047
    %v3049 = vand.u32 %v47, 4294901760
    %3050 = vmatmul.f32.gmra.mxu0 %v3049
    %v3051 = vpop.f32.mrf.mxu0
    %v3052 = vadd.f32 %v2921, %v3051
    %v3053 = vand.u32 %v48, 4294901760
    %3054 = vmatmul.f32.gmra.mxu0 %v3053
    %v3055 = vpop.f32.mrf.mxu0
    %v3056 = vadd.f32 %v2927, %v3055
    %3057 = vdwg.mxu0
    %v3058 = vand.u32 %v2347, 4294901760
    %3059 = vmatpush.msra.mxu0 %v3058
    %v3060 = vand.u32 %v2343, 4294901760
    %3061 = vmatpush.msra.mxu0 %v3060
    %v3062 = vand.u32 %v2339, 4294901760
    %3063 = vmatpush.msra.mxu0 %v3062
    %v3064 = vand.u32 %v2335, 4294901760
    %3065 = vmatpush.msra.mxu0 %v3064
    %v3066 = vand.u32 %v2331, 4294901760
    %3067 = vmatpush.msra.mxu0 %v3066
    %v3068 = vand.u32 %v2327, 4294901760
    %3069 = vmatpush.msra.mxu0 %v3068
    %v3070 = vand.u32 %v2323, 4294901760
    %3071 = vmatpush.msra.mxu0 %v3070
    %v3072 = vand.u32 %v2319, 4294901760
    %3073 = vmatpush.msra.mxu0 %v3072
    %v3074 = vand.u32 %v2315, 4294901760
    %3075 = vmatpush.msra.mxu0 %v3074
    %v3076 = vand.u32 %v2311, 4294901760
    %3077 = vmatpush.msra.mxu0 %v3076
    %v3078 = vand.u32 %v2307, 4294901760
    %3079 = vmatpush.msra.mxu0 %v3078
    %v3080 = vand.u32 %v2303, 4294901760
    %3081 = vmatpush.msra.mxu0 %v3080
    %v3082 = vand.u32 %v2299, 4294901760
    %3083 = vmatpush.msra.mxu0 %v3082
    %v3084 = vand.u32 %v2295, 4294901760
    %3085 = vmatpush.msra.mxu0 %v3084
    %v3086 = vand.u32 %v2291, 4294901760
    %3087 = vmatpush.msra.mxu0 %v3086
    %v3088 = vand.u32 %v2287, 4294901760
    %3089 = vmatpush.msra.mxu0 %v3088
    %v3090 = vand.u32 %v33, 4294901760
    %3091 = vmatmul.f32.gmra.mxu0 %v3090
    %v3092 = vpop.f32.mrf.mxu0
    %v3093 = vadd.f32 %v2996, %v3092
    %v3094 = vand.u32 %v34, 4294901760
    %3095 = vmatmul.f32.gmra.mxu0 %v3094
    %v3096 = vpop.f32.mrf.mxu0
    %v3097 = vadd.f32 %v3000, %v3096
    %v3098 = vand.u32 %v35, 4294901760
    %3099 = vmatmul.f32.gmra.mxu0 %v3098
    %v3100 = vpop.f32.mrf.mxu0
    %v3101 = vadd.f32 %v3004, %v3100
    %v3102 = vand.u32 %v36, 4294901760
    %3103 = vmatmul.f32.gmra.mxu0 %v3102
    %v3104 = vpop.f32.mrf.mxu0
    %v3105 = vadd.f32 %v3008, %v3104
    %v3106 = vand.u32 %v37, 4294901760
    %3107 = vmatmul.f32.gmra.mxu0 %v3106
    %v3108 = vpop.f32.mrf.mxu0
    %v3109 = vadd.f32 %v3012, %v3108
    %v3110 = vand.u32 %v38, 4294901760
    %3111 = vmatmul.f32.gmra.mxu0 %v3110
    %v3112 = vpop.f32.mrf.mxu0
    %v3113 = vadd.f32 %v3016, %v3112
    %v3114 = vand.u32 %v39, 4294901760
    %3115 = vmatmul.f32.gmra.mxu0 %v3114
    %v3116 = vpop.f32.mrf.mxu0
    %v3117 = vadd.f32 %v3020, %v3116
    %v3118 = vand.u32 %v40, 4294901760
    %3119 = vmatmul.f32.gmra.mxu0 %v3118
    %v3120 = vpop.f32.mrf.mxu0
    %v3121 = vadd.f32 %v3024, %v3120
    %v3122 = vand.u32 %v41, 4294901760
    %3123 = vmatmul.f32.gmra.mxu0 %v3122
    %v3124 = vpop.f32.mrf.mxu0
    %v3125 = vadd.f32 %v3028, %v3124
    %v3126 = vand.u32 %v42, 4294901760
    %3127 = vmatmul.f32.gmra.mxu0 %v3126
    %v3128 = vpop.f32.mrf.mxu0
    %v3129 = vadd.f32 %v3032, %v3128
    %v3130 = vand.u32 %v43, 4294901760
    %3131 = vmatmul.f32.gmra.mxu0 %v3130
    %v3132 = vpop.f32.mrf.mxu0
    %v3133 = vadd.f32 %v3036, %v3132
    %v3134 = vand.u32 %v44, 4294901760
    %3135 = vmatmul.f32.gmra.mxu0 %v3134
    %v3136 = vpop.f32.mrf.mxu0
    %v3137 = vadd.f32 %v3040, %v3136
    %v3138 = vand.u32 %v45, 4294901760
    %3139 = vmatmul.f32.gmra.mxu0 %v3138
    %v3140 = vpop.f32.mrf.mxu0
    %v3141 = vadd.f32 %v3044, %v3140
    %v3142 = vand.u32 %v46, 4294901760
    %3143 = vmatmul.f32.gmra.mxu0 %v3142
    %v3144 = vpop.f32.mrf.mxu0
    %v3145 = vadd.f32 %v3048, %v3144
    %v3146 = vand.u32 %v47, 4294901760
    %3147 = vmatmul.f32.gmra.mxu0 %v3146
    %v3148 = vpop.f32.mrf.mxu0
    %v3149 = vadd.f32 %v3052, %v3148
    %v3150 = vand.u32 %v48, 4294901760
    %3151 = vmatmul.f32.gmra.mxu0 %v3150
    %v3152 = vpop.f32.mrf.mxu0
    %v3153 = vadd.f32 %v3056, %v3152
    %3154 = vdwg.mxu0
    %v3155 = vmax.f32 %v3093, 0.0
    %v3156 = vmax.f32 %v3097, 0.0
    %v3157 = vmax.f32 %v3101, 0.0
    %v3158 = vmax.f32 %v3105, 0.0
    %v3159 = vmax.f32 %v3109, 0.0
    %v3160 = vmax.f32 %v3113, 0.0
    %v3161 = vmax.f32 %v3117, 0.0
    %v3162 = vmax.f32 %v3121, 0.0
    %v3163 = vmax.f32 %v3125, 0.0
    %v3164 = vmax.f32 %v3129, 0.0
    %v3165 = vmax.f32 %v3133, 0.0
    %v3166 = vmax.f32 %v3137, 0.0
    %v3167 = vmax.f32 %v3141, 0.0
    %v3168 = vmax.f32 %v3145, 0.0
    %v3169 = vmax.f32 %v3149, 0.0
    %v3170 = vmax.f32 %v3153, 0.0
    %3171 = vst [vmem:[%s4] sm:$0xff] %v3155
    %3172 = vst [vmem:[%s4 + $0x10] sm:$0xff] %v3156
    %3173 = vst [vmem:[%s4 + $0x20] sm:$0xff] %v3157
    %3174 = vst [vmem:[%s4 + $0x30] sm:$0xff] %v3158
    %3175 = vst [vmem:[%s4 + $0x40] sm:$0xff] %v3159
    %3176 = vst [vmem:[%s4 + $0x50] sm:$0xff] %v3160
    %3177 = vst [vmem:[%s4 + $0x60] sm:$0xff] %v3161
    %3178 = vst [vmem:[%s4 + $0x70] sm:$0xff] %v3162
    %3179 = vst [vmem:[%s4 + $0x80] sm:$0xff] %v3163
    %3180 = vst [vmem:[%s4 + $0x90] sm:$0xff] %v3164
    %3181 = vst [vmem:[%s4 + $0xa0] sm:$0xff] %v3165
    %3182 = vst [vmem:[%s4 + $0xb0] sm:$0xff] %v3166
    %3183 = vst [vmem:[%s4 + $0xc0] sm:$0xff] %v3167
    %3184 = vst [vmem:[%s4 + $0xd0] sm:$0xff] %v3168
    %3185 = vst [vmem:[%s4 + $0xe0] sm:$0xff] %v3169
    %3186 = vst [vmem:[%s4 + $0xf0] sm:$0xff] %v3170
    %3187 = vst.msk [vmem:[%s4 + $0x8] sm:$0xff] %vm69, %v49
    %3188 = vst.msk [vmem:[%s4 + $0x18] sm:$0xff] %vm69, %v50
    %3189 = vst.msk [vmem:[%s4 + $0x28] sm:$0xff] %vm69, %v51
    %3190 = vst.msk [vmem:[%s4 + $0x38] sm:$0xff] %vm69, %v52
    %3191 = vst.msk [vmem:[%s4 + $0x48] sm:$0xff] %vm69, %v53
    %3192 = vst.msk [vmem:[%s4 + $0x58] sm:$0xff] %vm69, %v54
    %3193 = vst.msk [vmem:[%s4 + $0x68] sm:$0xff] %vm69, %v55
    %3194 = vst.msk [vmem:[%s4 + $0x78] sm:$0xff] %vm69, %v56
    %3195 = vst.msk [vmem:[%s4 + $0x88] sm:$0xff] %vm69, %v57
    %3196 = vst.msk [vmem:[%s4 + $0x98] sm:$0xff] %vm69, %v58
    %3197 = vst.msk [vmem:[%s4 + $0xa8] sm:$0xff] %vm69, %v59
    %3198 = vst.msk [vmem:[%s4 + $0xb8] sm:$0xff] %vm69, %v60
    %3199 = vst.msk [vmem:[%s4 + $0xc8] sm:$0xff] %vm69, %v61
    %3200 = vst.msk [vmem:[%s4 + $0xd8] sm:$0xff] %vm69, %v62
    %3201 = vst.msk [vmem:[%s4 + $0xe8] sm:$0xff] %vm69, %v63
    %3202 = vst.msk [vmem:[%s4 + $0xf8] sm:$0xff] %vm69, %v64
    // Predicated region
    $region22: #{tpu_custom_call.1} parent=1 // pred_check
      _
    $region23: #{tpu_custom_call.1} parent=1 // pred_check_branch
      %3204 = sbr.rel (0) target = $region25
    $region24: #{tpu_custom_call.1} parent=1 // pred_region
      _
    $region25: #{tpu_custom_call.1} parent=1 // pred_fallthru
      _
    // Predicated region
    $region26: #{tpu_custom_call.1} parent=1 // pred_check
      _
    $region27: #{tpu_custom_call.1} parent=1 // pred_check_branch
      %3206 = sbr.rel (0) target = $region29
    $region28: #{tpu_custom_call.1} parent=1 // pred_region
      _
    $region29: #{tpu_custom_call.1} parent=1 // pred_fallthru
      _
    %3207 = vsyncpa [#allocation3], 1

</llo_original>
